<compile_context>
chip_gen: v5e
topology: v5e:2x2
jax: 0.10.0
libtpu: 0.0.40
codegen_flags: <defaults>
</compile_context>

<pallas_src>
import functools

import jax
import jax.numpy as jnp
from jax import lax
from jax.experimental import pallas as pl
from jax.experimental.pallas import tpu as pltpu


def _basic_block_kernel(x_ref, s1_ref, b1_ref, w1_ref, s2_ref, b2_ref, w2_ref,
                        o_ref):
    """One block of B images per grid step, flattened (B*H, W*C) layout.

    x_ref : (B, H, WC)      input tile, WC = W*C (lane-dense, multiple of 128)
    s*_ref: (1, WC)         folded BN scale / bias, pre-tiled across W
    w*_ref: (3*WC, WC)      K-stacked block-banded conv weights (dy-major)
    o_ref : (B, H, WC)      output tile
    """
    B, H, WC = x_ref.shape
    BH = B * H

    # Per-image row index -> halo masks (hoisted; reused by both convs).
    row = lax.broadcasted_iota(jnp.int32, (BH, WC), 0)
    h = row % H
    not_top = h != 0          # row h-1 exists within the same image
    not_bot = h != (H - 1)    # row h+1 exists within the same image

    mm_dtype = w1_ref.dtype   # bf16 or f32 matmul operands; accumulation is f32

    def conv3x3(t, w_ref):
        # t: (BH, WC) f32, pre-activated.  W-direction SAME padding is folded into
        # the banded weights; the H-direction shift uses XLU roll + a row mask.
        up = jnp.where(not_top, pltpu.roll(t, shift=1, axis=0), 0.0)
        dn = jnp.where(not_bot, pltpu.roll(t, shift=BH - 1, axis=0), 0.0)
        cat = jnp.concatenate([up, t, dn], axis=1)              # (BH, 3*WC)
        return jnp.dot(cat.astype(mm_dtype), w_ref[...],
                       preferred_element_type=jnp.float32)      # (BH, WC)

    # BN1 + ReLU -> conv1 -> BN2 + ReLU -> conv2.
    x0 = x_ref[...].reshape(BH, WC).astype(jnp.float32)
    t1 = jnp.maximum(x0 * s1_ref[...] + b1_ref[...], 0.0)
    y1 = conv3x3(t1, w1_ref)
    t2 = jnp.maximum(y1 * s2_ref[...] + b2_ref[...], 0.0)
    y2 = conv3x3(t2, w2_ref)

    # Residual add: re-read the (VMEM-resident) input block at the store site
    # instead of keeping x live across both convs.  Single lane-dense store.
    res = x_ref[...].reshape(BH, WC).astype(jnp.float32)
    o_ref[...] = (y2 + res).reshape(B, H, WC).astype(o_ref.dtype)


def make_banded_conv_weights(w_hwio, W, compute_dtype=jnp.float32):
    """HWIO (3, 3, Cin, Cout) -> (3*W*Cin, W*Cout) K-stacked block-banded matrix.

    For each kernel row dy:
      M_dy[wi*Cin + ci, wo*Cout + co] = w[dy, dx, ci, co]  where  wi = wo + dx - 1
    (zero outside the band), i.e. SAME padding along W is folded into the matmul.
    The three dy matrices are stacked along K in [up, center, down] order to match
    the kernel's jnp.concatenate([up, t, dn], axis=1).
    """
    kh, kw, cin, cout = w_hwio.shape
    mats = []
    for dy in range(kh):
        m = jnp.zeros((W * cin, W * cout), w_hwio.dtype)
        for dx in range(kw):
            band = jnp.eye(W, W, k=1 - dx, dtype=w_hwio.dtype)  # wi == wo + dx - 1
            m = m + jnp.kron(band, w_hwio[dy, dx])
        mats.append(m)
    return jnp.concatenate(mats, axis=0).astype(compute_dtype)


def prepare_basic_block_params(s1, b1, w1_hwio, s2, b2, w2_hwio, W,
                               compute_dtype=jnp.float32):
    """Hoisted parameter preprocessing (call once at parameter-load time)."""
    C = s1.shape[0]
    kh, kw, cin, cout = w1_hwio.shape
    assert (kh, kw) == (3, 3) and cin == C and cout == C, "3x3 conv, inplanes==planes"
    assert w2_hwio.shape == (3, 3, C, C)
    WC = W * C
    s1t = jnp.tile(s1, W).reshape(1, WC).astype(jnp.float32)
    b1t = jnp.tile(b1, W).reshape(1, WC).astype(jnp.float32)
    s2t = jnp.tile(s2, W).reshape(1, WC).astype(jnp.float32)
    b2t = jnp.tile(b2, W).reshape(1, WC).astype(jnp.float32)
    w1b = make_banded_conv_weights(w1_hwio, W, compute_dtype)
    w2b = make_banded_conv_weights(w2_hwio, W, compute_dtype)
    return (s1t, b1t, w1b, s2t, b2t, w2b)


def basic_block_pallas(x_nhwc, params, *, block_batch=None):
    """x_nhwc: (N, H, W, C); params from prepare_basic_block_params. Returns NHWC."""
    N, H, W, C = x_nhwc.shape
    WC = W * C
    s1t, b1t, w1b, s2t, b2t, w2b = params

    # Design assumptions (stride=1, no downsample, lane-dense layout).
    assert WC % 128 == 0, "W*C must be a multiple of 128 (lane-dense layout)"
    assert w1b.shape == (3 * WC, WC) and w2b.shape == (3 * WC, WC)

    # Pick images-per-block: aim for B*H >= 128 (full MXU rows), B must divide N.
    if block_batch is None:
        block_batch = min(N, max(1, 128 // H))
    B = max(1, min(block_batch, N))
    while N % B:
        B -= 1
    assert (B * H) % 8 == 0, "B*H must be a multiple of 8 (sublane tiling)"

    # Free view: C is innermost, so (N, H, W, C) -> (N, H, W*C) is contiguous.
    x_flat = x_nhwc.reshape(N, H, WC)

    flops = 2 * (2 * N * H * (3 * WC) * WC)           # two convs
    bytes_accessed = (2 * x_flat.size * x_flat.dtype.itemsize
                      + (w1b.size + w2b.size) * w1b.dtype.itemsize
                      + 4 * WC * 4)

    out_flat = pl.pallas_call(
        _basic_block_kernel,
        out_shape=jax.ShapeDtypeStruct((N, H, WC), x_nhwc.dtype),
        grid_spec=pltpu.PrefetchScalarGridSpec(
            num_scalar_prefetch=0,
            grid=(N // B,),
            in_specs=[
                pl.BlockSpec((B, H, WC), lambda n: (n, 0, 0)),
                pl.BlockSpec((1, WC), lambda n: (0, 0)),
                pl.BlockSpec((1, WC), lambda n: (0, 0)),
                pl.BlockSpec((3 * WC, WC), lambda n: (0, 0)),
                pl.BlockSpec((1, WC), lambda n: (0, 0)),
                pl.BlockSpec((1, WC), lambda n: (0, 0)),
                pl.BlockSpec((3 * WC, WC), lambda n: (0, 0)),
            ],
            out_specs=pl.BlockSpec((B, H, WC), lambda n: (n, 0, 0)),
        ),
        compiler_params=pltpu.CompilerParams(
            dimension_semantics=("parallel",)),
        cost_estimate=pl.CostEstimate(flops=flops, transcendentals=0,
                                      bytes_accessed=bytes_accessed),
    )(x_flat, s1t, b1t, w1b, s2t, b2t, w2b)

    return out_flat.reshape(N, H, W, C)


def basic_block_reference(x_nhwc, s1, b1, w1, s2, b2, w2):
    """Pure-JAX reference (same semantics) for validation."""
    C = x_nhwc.shape[-1]

    def conv(t, w):
        return lax.conv_general_dilated(
            t, w, window_strides=(1, 1), padding="SAME",
            dimension_numbers=("NHWC", "HWIO", "NHWC"))

    t = jnp.maximum(x_nhwc * s1.reshape(1, 1, 1, C) + b1.reshape(1, 1, 1, C), 0.0)
    t = conv(t, w1)
    t = jnp.maximum(t * s2.reshape(1, 1, 1, C) + b2.reshape(1, 1, 1, C), 0.0)
    t = conv(t, w2)
    return t + x_nhwc


def fold_bn(gamma, beta, mean, var, eps=1e-5):
    scale = gamma / jnp.sqrt(var + eps)
    bias = beta - mean * scale
    return scale, bias


if __name__ == "__main__":
    key = jax.random.PRNGKey(0)
    ks = jax.random.split(key, 12)

    # Small shapes: inplanes=planes=8 (downsample=None implies inplanes==planes),
    # spatial 16x16 -> W*C = 128 (lane dense), N=16 images so that block_batch=8
    # gives M = B*H = 128 and a grid of length 2 (both v7x TensorCores busy).
    N, C, H, W = 16, 8, 16, 16

    # PyTorch-style NCHW input.
    x_nchw = jax.random.normal(ks[0], (N, C, H, W), dtype=jnp.float32)

    # Deterministic synthetic parameters (shapes from BasicBlock.__init__).
    g1 = 1.0 + 0.1 * jax.random.normal(ks[1], (C,), jnp.float32)
    bt1 = 0.1 * jax.random.normal(ks[2], (C,), jnp.float32)
    m1 = 0.1 * jax.random.normal(ks[3], (C,), jnp.float32)
    v1 = 0.5 + jnp.abs(jax.random.normal(ks[4], (C,), jnp.float32)) * 0.5
    g2 = 1.0 + 0.1 * jax.random.normal(ks[5], (C,), jnp.float32)
    bt2 = 0.1 * jax.random.normal(ks[6], (C,), jnp.float32)
    m2 = 0.1 * jax.random.normal(ks[7], (C,), jnp.float32)
    v2 = 0.5 + jnp.abs(jax.random.normal(ks[8], (C,), jnp.float32)) * 0.5

    # conv1 / conv2 weights: PyTorch (Cout, Cin, 3, 3), no bias.
    fan_in = C * 3 * 3
    w1_oihw = jax.random.normal(ks[9], (C, C, 3, 3), jnp.float32) / jnp.sqrt(fan_in)
    w2_oihw = jax.random.normal(ks[10], (C, C, 3, 3), jnp.float32) / jnp.sqrt(fan_in)

    # Glue: fold BN, reorder weights to HWIO, transpose input to NHWC.
    s1, b1 = fold_bn(g1, bt1, m1, v1)
    s2, b2 = fold_bn(g2, bt2, m2, v2)
    w1_hwio = jnp.transpose(w1_oihw, (2, 3, 1, 0))   # (3, 3, Cin, Cout)
    w2_hwio = jnp.transpose(w2_oihw, (2, 3, 1, 0))
    x_nhwc = jnp.transpose(x_nchw, (0, 2, 3, 1))

    # Parameter preprocessing hoisted out of the per-call path.
    params_f32 = prepare_basic_block_params(s1, b1, w1_hwio, s2, b2, w2_hwio, W,
                                            compute_dtype=jnp.float32)
    params_bf16 = prepare_basic_block_params(s1, b1, w1_hwio, s2, b2, w2_hwio, W,
                                             compute_dtype=jnp.bfloat16)

    fwd = jax.jit(functools.partial(basic_block_pallas, block_batch=8))

    ref_nhwc = basic_block_reference(x_nhwc, s1, b1, w1_hwio, s2, b2, w2_hwio)

    # f32 matmul-operand path.
    out_f32 = jax.block_until_ready(fwd(x_nhwc, params_f32))
    out_nchw = jnp.transpose(out_f32, (0, 3, 1, 2))  # back to PyTorch layout
    assert out_nchw.shape == (N, C, H, W)
    assert jnp.allclose(out_f32, ref_nhwc, rtol=1e-3, atol=1e-3), (
        "f32 path mismatch vs JAX reference")

    # bf16 matmul-operand path (v6e/v7x MXU-native; f32 elementwise + accumulation).
    out_bf16 = jax.block_until_ready(fwd(x_nhwc, params_bf16))
    assert jnp.allclose(out_bf16, ref_nhwc, rtol=5e-2, atol=5e-2), (
        "bf16 path mismatch vs JAX reference")

    print("KERNEL_OK")
</pallas_src>

<mosaic_0001>
module attributes {stable_mosaic.version = 11 : i64} {
  func.func @_basic_block_kernel(%arg0: i32, %arg1: memref<8x16x128xf32, #tpu.memory_space<vmem>>, %arg2: memref<1x128xf32, #tpu.memory_space<vmem>>, %arg3: memref<1x128xf32, #tpu.memory_space<vmem>>, %arg4: memref<384x128xf32, #tpu.memory_space<vmem>>, %arg5: memref<1x128xf32, #tpu.memory_space<vmem>>, %arg6: memref<1x128xf32, #tpu.memory_space<vmem>>, %arg7: memref<384x128xf32, #tpu.memory_space<vmem>>, %arg8: memref<8x16x128xf32, #tpu.memory_space<vmem>>) attributes {dimension_semantics = [#tpu.dimension_semantics<parallel>], iteration_bounds = array<i64: 2>, scalar_prefetch = 0 : i64, scratch_operands = 0 : i64, tpu.core_type = #tpu.core_type<tc>, window_params = [{transform_indices = @transform_0, window_bounds = array<i64: 8, 16, 128>}, {pipeline_mode = #tpu.pipeline_mode<synchronous>, transform_indices = @transform_1, window_bounds = array<i64: 1, 128>}, {pipeline_mode = #tpu.pipeline_mode<synchronous>, transform_indices = @transform_2, window_bounds = array<i64: 1, 128>}, {pipeline_mode = #tpu.pipeline_mode<synchronous>, transform_indices = @transform_3, window_bounds = array<i64: 384, 128>}, {pipeline_mode = #tpu.pipeline_mode<synchronous>, transform_indices = @transform_4, window_bounds = array<i64: 1, 128>}, {pipeline_mode = #tpu.pipeline_mode<synchronous>, transform_indices = @transform_5, window_bounds = array<i64: 1, 128>}, {pipeline_mode = #tpu.pipeline_mode<synchronous>, transform_indices = @transform_6, window_bounds = array<i64: 384, 128>}, {transform_indices = @transform_7, window_bounds = array<i64: 8, 16, 128>}]} {
    %0 = tpu.iota {dimensions = array<i32: 0>} : vector<128x128xi32>
    %c16_i32 = arith.constant 16 : i32
    %c0_i32 = arith.constant 0 : i32
    %1 = arith.cmpi eq, %c16_i32, %c0_i32 : i32
    %c1_i32 = arith.constant 1 : i32
    %2 = arith.select %1, %c1_i32, %c16_i32 : i32
    %3 = vector.broadcast %2 : i32 to vector<128x128xi32>
    %4 = arith.remsi %0, %3 : vector<128x128xi32>
    %c0_i32_0 = arith.constant 0 : i32
    %5 = vector.broadcast %c0_i32_0 : i32 to vector<128x128xi32>
    %6 = arith.cmpi ne, %4, %5 : vector<128x128xi32>
    %c0_i32_1 = arith.constant 0 : i32
    %7 = vector.broadcast %c0_i32_1 : i32 to vector<128x128xi32>
    %8 = arith.cmpi slt, %4, %7 : vector<128x128xi32>
    %c0_i32_2 = arith.constant 0 : i32
    %9 = arith.cmpi slt, %2, %c0_i32_2 : i32
    %10 = vector.broadcast %9 : i1 to vector<128x128xi1>
    %11 = vector.broadcast %10 : vector<128x128xi1> to vector<128x128xi1>
    %12 = arith.xori %8, %11 : vector<128x128xi1>
    %13 = arith.andi %12, %6 : vector<128x128xi1>
    %14 = vector.broadcast %2 : i32 to vector<128x128xi32>
    %15 = arith.addi %4, %14 : vector<128x128xi32>
    %16 = arith.select %13, %15, %4 : vector<128x128xi1>, vector<128x128xi32>
    %c0_i32_3 = arith.constant 0 : i32
    %17 = vector.broadcast %c0_i32_3 : i32 to vector<128x128xi32>
    %18 = arith.cmpi ne, %16, %17 : vector<128x128xi32>
    %c15_i32 = arith.constant 15 : i32
    %19 = vector.broadcast %c15_i32 : i32 to vector<128x128xi32>
    %20 = arith.cmpi ne, %16, %19 : vector<128x128xi32>
    %c0 = arith.constant 0 : index
    %c0_4 = arith.constant 0 : index
    %c0_5 = arith.constant 0 : index
    %21 = vector.load %arg1[%c0, %c0_4, %c0_5] : memref<8x16x128xf32, #tpu.memory_space<vmem>>, vector<8x16x128xf32>
    %22 = vector.shape_cast %21 : vector<8x16x128xf32> to vector<128x128xf32>
    %c0_6 = arith.constant 0 : index
    %c0_7 = arith.constant 0 : index
    %23 = vector.load %arg2[%c0_6, %c0_7] : memref<1x128xf32, #tpu.memory_space<vmem>>, vector<1x128xf32>
    %24 = vector.broadcast %23 : vector<1x128xf32> to vector<128x128xf32>
    %25 = arith.mulf %22, %24 : vector<128x128xf32>
    %c0_8 = arith.constant 0 : index
    %c0_9 = arith.constant 0 : index
    %26 = vector.load %arg3[%c0_8, %c0_9] : memref<1x128xf32, #tpu.memory_space<vmem>>, vector<1x128xf32>
    %27 = vector.broadcast %26 : vector<1x128xf32> to vector<128x128xf32>
    %28 = arith.addf %25, %27 : vector<128x128xf32>
    %cst = arith.constant 0.000000e+00 : f32
    %29 = vector.broadcast %cst : f32 to vector<128x128xf32>
    %30 = arith.maximumf %28, %29 : vector<128x128xf32>
    %c1_i32_10 = arith.constant 1 : i32
    %31 = tpu.dynamic_rotate %30 by %c1_i32_10 dim 0 : vector<128x128xf32>, i32 -> vector<128x128xf32>
    %cst_11 = arith.constant 0.000000e+00 : f32
    %32 = vector.broadcast %cst_11 : f32 to vector<128x128xf32>
    %33 = arith.select %18, %31, %32 : vector<128x128xi1>, vector<128x128xf32>
    %c127_i32 = arith.constant 127 : i32
    %34 = tpu.dynamic_rotate %30 by %c127_i32 dim 0 : vector<128x128xf32>, i32 -> vector<128x128xf32>
    %cst_12 = arith.constant 0.000000e+00 : f32
    %35 = vector.broadcast %cst_12 : f32 to vector<128x128xf32>
    %36 = arith.select %20, %34, %35 : vector<128x128xi1>, vector<128x128xf32>
    %37 = tpu.concatenate %33, %30, %36 in 1 : vector<128x128xf32>, vector<128x128xf32>, vector<128x128xf32> -> vector<128x384xf32>
    %c0_13 = arith.constant 0 : index
    %c0_14 = arith.constant 0 : index
    %38 = vector.load %arg4[%c0_13, %c0_14] : memref<384x128xf32, #tpu.memory_space<vmem>>, vector<384x128xf32>
    %cst_15 = arith.constant dense<0.000000e+00> : vector<128x128xf32>
    %39 = tpu.matmul %37, %38, %cst_15 {dimension_numbers = #tpu.dot_dimension_numbers<[1], [0], [0], [1], [0, 0, 1, 1], [], []>} : vector<128x384xf32>, vector<384x128xf32>, vector<128x128xf32> -> vector<128x128xf32>
    %c0_16 = arith.constant 0 : index
    %c0_17 = arith.constant 0 : index
    %40 = vector.load %arg5[%c0_16, %c0_17] : memref<1x128xf32, #tpu.memory_space<vmem>>, vector<1x128xf32>
    %41 = vector.broadcast %40 : vector<1x128xf32> to vector<128x128xf32>
    %42 = arith.mulf %39, %41 : vector<128x128xf32>
    %c0_18 = arith.constant 0 : index
    %c0_19 = arith.constant 0 : index
    %43 = vector.load %arg6[%c0_18, %c0_19] : memref<1x128xf32, #tpu.memory_space<vmem>>, vector<1x128xf32>
    %44 = vector.broadcast %43 : vector<1x128xf32> to vector<128x128xf32>
    %45 = arith.addf %42, %44 : vector<128x128xf32>
    %cst_20 = arith.constant 0.000000e+00 : f32
    %46 = vector.broadcast %cst_20 : f32 to vector<128x128xf32>
    %47 = arith.maximumf %45, %46 : vector<128x128xf32>
    %c1_i32_21 = arith.constant 1 : i32
    %48 = tpu.dynamic_rotate %47 by %c1_i32_21 dim 0 : vector<128x128xf32>, i32 -> vector<128x128xf32>
    %cst_22 = arith.constant 0.000000e+00 : f32
    %49 = vector.broadcast %cst_22 : f32 to vector<128x128xf32>
    %50 = arith.select %18, %48, %49 : vector<128x128xi1>, vector<128x128xf32>
    %c127_i32_23 = arith.constant 127 : i32
    %51 = tpu.dynamic_rotate %47 by %c127_i32_23 dim 0 : vector<128x128xf32>, i32 -> vector<128x128xf32>
    %cst_24 = arith.constant 0.000000e+00 : f32
    %52 = vector.broadcast %cst_24 : f32 to vector<128x128xf32>
    %53 = arith.select %20, %51, %52 : vector<128x128xi1>, vector<128x128xf32>
    %54 = tpu.concatenate %50, %47, %53 in 1 : vector<128x128xf32>, vector<128x128xf32>, vector<128x128xf32> -> vector<128x384xf32>
    %c0_25 = arith.constant 0 : index
    %c0_26 = arith.constant 0 : index
    %55 = vector.load %arg7[%c0_25, %c0_26] : memref<384x128xf32, #tpu.memory_space<vmem>>, vector<384x128xf32>
    %cst_27 = arith.constant dense<0.000000e+00> : vector<128x128xf32>
    %56 = tpu.matmul %54, %55, %cst_27 {dimension_numbers = #tpu.dot_dimension_numbers<[1], [0], [0], [1], [0, 0, 1, 1], [], []>} : vector<128x384xf32>, vector<384x128xf32>, vector<128x128xf32> -> vector<128x128xf32>
    %c0_28 = arith.constant 0 : index
    %c0_29 = arith.constant 0 : index
    %c0_30 = arith.constant 0 : index
    %57 = vector.load %arg1[%c0_28, %c0_29, %c0_30] : memref<8x16x128xf32, #tpu.memory_space<vmem>>, vector<8x16x128xf32>
    %58 = vector.shape_cast %57 : vector<8x16x128xf32> to vector<128x128xf32>
    %59 = arith.addf %56, %58 : vector<128x128xf32>
    %60 = vector.shape_cast %59 : vector<128x128xf32> to vector<8x16x128xf32>
    %c0_31 = arith.constant 0 : index
    %c0_32 = arith.constant 0 : index
    %c0_33 = arith.constant 0 : index
    %61 = vector.load %arg8[%c0_31, %c0_32, %c0_33] : memref<8x16x128xf32, #tpu.memory_space<vmem>>, vector<8x16x128xf32>
    tpu.vector_store %arg8[%c0_31, %c0_32, %c0_33], %60 {strides = array<i32>} : memref<8x16x128xf32, #tpu.memory_space<vmem>>, vector<8x16x128xf32>,
    return
  }
  func.func @transform_0(%arg0: i32) -> (i32, i32, i32) {
    %c0_i32 = arith.constant 0 : i32
    %c0_i32_0 = arith.constant 0 : i32
    %c0_i32_1 = arith.constant 0 : i32
    return %arg0, %c0_i32, %c0_i32_0 : i32, i32, i32
  }
  func.func @transform_1(%arg0: i32) -> (i32, i32) {
    %c0_i32 = arith.constant 0 : i32
    %c0_i32_0 = arith.constant 0 : i32
    %c0_i32_1 = arith.constant 0 : i32
    return %c0_i32, %c0_i32_0 : i32, i32
  }
  func.func @transform_2(%arg0: i32) -> (i32, i32) {
    %c0_i32 = arith.constant 0 : i32
    %c0_i32_0 = arith.constant 0 : i32
    %c0_i32_1 = arith.constant 0 : i32
    return %c0_i32, %c0_i32_0 : i32, i32
  }
  func.func @transform_3(%arg0: i32) -> (i32, i32) {
    %c0_i32 = arith.constant 0 : i32
    %c0_i32_0 = arith.constant 0 : i32
    %c0_i32_1 = arith.constant 0 : i32
    return %c0_i32, %c0_i32_0 : i32, i32
  }
  func.func @transform_4(%arg0: i32) -> (i32, i32) {
    %c0_i32 = arith.constant 0 : i32
    %c0_i32_0 = arith.constant 0 : i32
    %c0_i32_1 = arith.constant 0 : i32
    return %c0_i32, %c0_i32_0 : i32, i32
  }
  func.func @transform_5(%arg0: i32) -> (i32, i32) {
    %c0_i32 = arith.constant 0 : i32
    %c0_i32_0 = arith.constant 0 : i32
    %c0_i32_1 = arith.constant 0 : i32
    return %c0_i32, %c0_i32_0 : i32, i32
  }
  func.func @transform_6(%arg0: i32) -> (i32, i32) {
    %c0_i32 = arith.constant 0 : i32
    %c0_i32_0 = arith.constant 0 : i32
    %c0_i32_1 = arith.constant 0 : i32
    return %c0_i32, %c0_i32_0 : i32, i32
  }
  func.func @transform_7(%arg0: i32) -> (i32, i32, i32) {
    %c0_i32 = arith.constant 0 : i32
    %c0_i32_0 = arith.constant 0 : i32
    %c0_i32_1 = arith.constant 0 : i32
    return %arg0, %c0_i32, %c0_i32_0 : i32, i32, i32
  }
}

</mosaic_0001>

<llo_original>
// kernel: basic_block_pallas.1
$region0: #{basic_block_pallas.1}
  #allocation0 [shape = 'u32[]', space=smem, size = 0x4, offset = 0x4, fixed_abs, tag = 'smem constant byte address 0x4 - core index']
  #allocation1 [shape = 'u32[72,128]{1,0:T(1,128)}', space=vmem, size = 0x9000, scoped, tag = 'internal scratch']
  %s0 = inlined_call_operand.vmem [shape: f32[16,16,128], index: 0, kind: input, shape index: {}]
  %s1 = inlined_call_operand.vmem [shape: f32[1,128], index: 1, kind: input, shape index: {}]
  %s2 = inlined_call_operand.vmem [shape: f32[1,128], index: 2, kind: input, shape index: {}]
  %s3 = inlined_call_operand.vmem [shape: f32[384,128], index: 3, kind: input, shape index: {}]
  %s4 = inlined_call_operand.vmem [shape: f32[1,128], index: 4, kind: input, shape index: {}]
  %s5 = inlined_call_operand.vmem [shape: f32[1,128], index: 5, kind: input, shape index: {}]
  %s6 = inlined_call_operand.vmem [shape: f32[384,128], index: 6, kind: input, shape index: {}]
  %s7 = inlined_call_operand.vmem [shape: f32[16,16,128], index: 7, kind: output, shape index: {}]
  %s8 = sld [smem:[#allocation0]]
  $region61: #{basic_block_pallas.1} parent=0
    _
  %s10 = ssub.s32 1, %s8
  %s11 = scalar_select 0, %s10, %s8
  loop: start=0, step=1, limit=4
  $region2: #{basic_block_pallas.1} parent=0 // loop_pre_header
    _
  $region3: #{basic_block_pallas.1} parent=0 // loop_header
    %s13 = sphi 0, %s17
    %p14 = scmp.ge.s32.totalorder %s13, 4
    %s23 = sphi 0, %s25
    %s26 = sphi 0, %s23
    %s27 = sphi 0, %s26
    %s43 = sphi 0, %s27
    %s47 = sphi 0, %s47
    %s49 = sphi 0, %s47
    %s50 = sphi 0, %s49
    %s64 = sphi 0, %s50
    %s68 = sphi 0, %s68
    %s70 = sphi 0, %s68
    %s71 = sphi 0, %s70
    %s85 = sphi 0, %s71
    %s89 = sphi 0, %s89
    %s91 = sphi 0, %s89
    %s92 = sphi 0, %s91
    %s106 = sphi 0, %s92
    %s110 = sphi 0, %s110
    %s112 = sphi 0, %s110
    %s113 = sphi 0, %s112
    %s127 = sphi 0, %s113
    %s131 = sphi 0, %s131
    %s133 = sphi 0, %s131
    %s134 = sphi 0, %s133
    %s148 = sphi 0, %s134
    %s152 = sphi 0, %s152
    %s154 = sphi 0, %s152
    %s155 = sphi 0, %s154
    %s169 = sphi 0, %s155
    %s175 = sphi 0, %s177
    %s178 = sphi 0, %s175
    %s179 = sphi 0, %s178
    %s195 = sphi 0, %s179
  $region4: #{basic_block_pallas.1} parent=0 // loop_header_branch
    %16 = sbr.rel (%p14) target = $region8
  $region5: #{basic_block_pallas.1} parent=0 // loop_body
    %s18 = ssub.s32 %s13, 1
    %s19 = ssub.s32 %s13, 2
    %s20 = sadd.s32 %s13, 1
    %s21 = ssub.s32 %s13, %s20
    %p22 = scmp.eq.s32.totalorder %s21, 0
    %s24 = sadd.s32 %s23, 1
    %s25 = scalar_select %p22, %s23, %s24
    %p28 = pneg %p22
    %p29 = scmp.eq.s32.totalorder %s13, 1
    %p30 = por %p28, %p29
    %p31 = scmp.ne.s32.totalorder %s23, %s26
    %p32 = scmp.eq.s32.totalorder %s13, 0
    %p33 = por %p31, %p32
    %p34 = scmp.ne.s32.totalorder %s23, %s26
    %p35 = scmp.eq.s32.totalorder %s18, 1
    %p36 = por %p34, %p35
    %p37 = scmp.ne.s32.totalorder %s26, %s27
    %p38 = scmp.eq.s32.totalorder %s18, 0
    %p39 = por %p37, %p38
    %p40 = scmp.ne.s32.totalorder %s26, %s27
    %p41 = scmp.eq.s32.totalorder %s19, 1
    %p42 = por %p40, %p41
    %p44 = scmp.ne.s32.totalorder %s27, %s43
    %p45 = scmp.eq.s32.totalorder %s19, 0
    %p46 = por %p44, %p45
    %s48 = sadd.s32 %s47, 1
    %p51 = scmp.eq.s32.totalorder %s13, 1
    %p52 = scmp.ne.s32.totalorder %s47, %s49
    %p53 = scmp.eq.s32.totalorder %s13, 0
    %p54 = por %p52, %p53
    %p55 = scmp.ne.s32.totalorder %s47, %s49
    %p56 = scmp.eq.s32.totalorder %s18, 1
    %p57 = por %p55, %p56
    %p58 = scmp.ne.s32.totalorder %s49, %s50
    %p59 = scmp.eq.s32.totalorder %s18, 0
    %p60 = por %p58, %p59
    %p61 = scmp.ne.s32.totalorder %s49, %s50
    %p62 = scmp.eq.s32.totalorder %s19, 1
    %p63 = por %p61, %p62
    %p65 = scmp.ne.s32.totalorder %s50, %s64
    %p66 = scmp.eq.s32.totalorder %s19, 0
    %p67 = por %p65, %p66
    %s69 = sadd.s32 %s68, 1
    %p72 = scmp.eq.s32.totalorder %s13, 1
    %p73 = scmp.ne.s32.totalorder %s68, %s70
    %p74 = scmp.eq.s32.totalorder %s13, 0
    %p75 = por %p73, %p74
    %p76 = scmp.ne.s32.totalorder %s68, %s70
    %p77 = scmp.eq.s32.totalorder %s18, 1
    %p78 = por %p76, %p77
    %p79 = scmp.ne.s32.totalorder %s70, %s71
    %p80 = scmp.eq.s32.totalorder %s18, 0
    %p81 = por %p79, %p80
    %p82 = scmp.ne.s32.totalorder %s70, %s71
    %p83 = scmp.eq.s32.totalorder %s19, 1
    %p84 = por %p82, %p83
    %p86 = scmp.ne.s32.totalorder %s71, %s85
    %p87 = scmp.eq.s32.totalorder %s19, 0
    %p88 = por %p86, %p87
    %s90 = sadd.s32 %s89, 1
    %p93 = scmp.eq.s32.totalorder %s13, 1
    %p94 = scmp.ne.s32.totalorder %s89, %s91
    %p95 = scmp.eq.s32.totalorder %s13, 0
    %p96 = por %p94, %p95
    %p97 = scmp.ne.s32.totalorder %s89, %s91
    %p98 = scmp.eq.s32.totalorder %s18, 1
    %p99 = por %p97, %p98
    %p100 = scmp.ne.s32.totalorder %s91, %s92
    %p101 = scmp.eq.s32.totalorder %s18, 0
    %p102 = por %p100, %p101
    %p103 = scmp.ne.s32.totalorder %s91, %s92
    %p104 = scmp.eq.s32.totalorder %s19, 1
    %p105 = por %p103, %p104
    %p107 = scmp.ne.s32.totalorder %s92, %s106
    %p108 = scmp.eq.s32.totalorder %s19, 0
    %p109 = por %p107, %p108
    %s111 = sadd.s32 %s110, 1
    %p114 = scmp.eq.s32.totalorder %s13, 1
    %p115 = scmp.ne.s32.totalorder %s110, %s112
    %p116 = scmp.eq.s32.totalorder %s13, 0
    %p117 = por %p115, %p116
    %p118 = scmp.ne.s32.totalorder %s110, %s112
    %p119 = scmp.eq.s32.totalorder %s18, 1
    %p120 = por %p118, %p119
    %p121 = scmp.ne.s32.totalorder %s112, %s113
    %p122 = scmp.eq.s32.totalorder %s18, 0
    %p123 = por %p121, %p122
    %p124 = scmp.ne.s32.totalorder %s112, %s113
    %p125 = scmp.eq.s32.totalorder %s19, 1
    %p126 = por %p124, %p125
    %p128 = scmp.ne.s32.totalorder %s113, %s127
    %p129 = scmp.eq.s32.totalorder %s19, 0
    %p130 = por %p128, %p129
    %s132 = sadd.s32 %s131, 1
    %p135 = scmp.eq.s32.totalorder %s13, 1
    %p136 = scmp.ne.s32.totalorder %s131, %s133
    %p137 = scmp.eq.s32.totalorder %s13, 0
    %p138 = por %p136, %p137
    %p139 = scmp.ne.s32.totalorder %s131, %s133
    %p140 = scmp.eq.s32.totalorder %s18, 1
    %p141 = por %p139, %p140
    %p142 = scmp.ne.s32.totalorder %s133, %s134
    %p143 = scmp.eq.s32.totalorder %s18, 0
    %p144 = por %p142, %p143
    %p145 = scmp.ne.s32.totalorder %s133, %s134
    %p146 = scmp.eq.s32.totalorder %s19, 1
    %p147 = por %p145, %p146
    %p149 = scmp.ne.s32.totalorder %s134, %s148
    %p150 = scmp.eq.s32.totalorder %s19, 0
    %p151 = por %p149, %p150
    %s153 = sadd.s32 %s152, 1
    %p156 = scmp.eq.s32.totalorder %s13, 1
    %p157 = scmp.ne.s32.totalorder %s152, %s154
    %p158 = scmp.eq.s32.totalorder %s13, 0
    %p159 = por %p157, %p158
    %p160 = scmp.ne.s32.totalorder %s152, %s154
    %p161 = scmp.eq.s32.totalorder %s18, 1
    %p162 = por %p160, %p161
    %p163 = scmp.ne.s32.totalorder %s154, %s155
    %p164 = scmp.eq.s32.totalorder %s18, 0
    %p165 = por %p163, %p164
    %p166 = scmp.ne.s32.totalorder %s154, %s155
    %p167 = scmp.eq.s32.totalorder %s19, 1
    %p168 = por %p166, %p167
    %p170 = scmp.ne.s32.totalorder %s155, %s169
    %p171 = scmp.eq.s32.totalorder %s19, 0
    %p172 = por %p170, %p171
    %s173 = ssub.s32 %s13, %s20
    %p174 = scmp.eq.s32.totalorder %s173, 0
    %s176 = sadd.s32 %s175, 1
    %s177 = scalar_select %p174, %s175, %s176
    %p180 = pneg %p174
    %p181 = scmp.eq.s32.totalorder %s13, 1
    %p182 = por %p180, %p181
    %p183 = scmp.ne.s32.totalorder %s175, %s178
    %p184 = scmp.eq.s32.totalorder %s13, 0
    %p185 = por %p183, %p184
    %p186 = scmp.ne.s32.totalorder %s175, %s178
    %p187 = scmp.eq.s32.totalorder %s18, 1
    %p188 = por %p186, %p187
    %p189 = scmp.ne.s32.totalorder %s178, %s179
    %p190 = scmp.eq.s32.totalorder %s18, 0
    %p191 = por %p189, %p190
    %p192 = scmp.ne.s32.totalorder %s178, %s179
    %p193 = scmp.eq.s32.totalorder %s19, 1
    %p194 = por %p192, %p193
    %p196 = scmp.ne.s32.totalorder %s179, %s195
    %p197 = scmp.eq.s32.totalorder %s19, 0
    %p198 = por %p196, %p197
    %p199 = scmp.le.s32.totalorder 1, %s13
    %p200 = scmp.lt.s32.totalorder %s13, 3
    %p201 = pnand %p199, %p200
    %p202 = pneg %p201
    // Predicated region
    $region9: #{basic_block_pallas.1} parent=5 // pred_check
      _
    $region10: #{basic_block_pallas.1} parent=5 // pred_check_branch
      %204 = sbr.rel (%p201) target = $region12
    $region11: #{basic_block_pallas.1} parent=5 // pred_region
      %s205 = ssub.s32 %s13, 1
      // Predicated region
      $region13: #{basic_block_pallas.1} parent=11 // pred_check
        %p206 = pneg %p60
      $region14: #{basic_block_pallas.1} parent=11 // pred_check_branch
        %208 = sbr.rel (%p206) target = $region16
      $region15: #{basic_block_pallas.1} parent=11 // pred_region
        _
      $region16: #{basic_block_pallas.1} parent=11 // pred_fallthru
        _
      // Predicated region
      $region17: #{basic_block_pallas.1} parent=11 // pred_check
        %p209 = pneg %p81
      $region18: #{basic_block_pallas.1} parent=11 // pred_check_branch
        %211 = sbr.rel (%p209) target = $region20
      $region19: #{basic_block_pallas.1} parent=11 // pred_region
        _
      $region20: #{basic_block_pallas.1} parent=11 // pred_fallthru
        _
      // Predicated region
      $region21: #{basic_block_pallas.1} parent=11 // pred_check
        %p212 = pneg %p102
      $region22: #{basic_block_pallas.1} parent=11 // pred_check_branch
        %214 = sbr.rel (%p212) target = $region24
      $region23: #{basic_block_pallas.1} parent=11 // pred_region
        _
      $region24: #{basic_block_pallas.1} parent=11 // pred_fallthru
        _
      // Predicated region
      $region25: #{basic_block_pallas.1} parent=11 // pred_check
        %p215 = pneg %p123
      $region26: #{basic_block_pallas.1} parent=11 // pred_check_branch
        %217 = sbr.rel (%p215) target = $region28
      $region27: #{basic_block_pallas.1} parent=11 // pred_region
        _
      $region28: #{basic_block_pallas.1} parent=11 // pred_fallthru
        _
      // Predicated region
      $region29: #{basic_block_pallas.1} parent=11 // pred_check
        %p218 = pneg %p144
      $region30: #{basic_block_pallas.1} parent=11 // pred_check_branch
        %220 = sbr.rel (%p218) target = $region32
      $region31: #{basic_block_pallas.1} parent=11 // pred_region
        _
      $region32: #{basic_block_pallas.1} parent=11 // pred_fallthru
        _
      // Predicated region
      $region33: #{basic_block_pallas.1} parent=11 // pred_check
        %p221 = pneg %p165
      $region34: #{basic_block_pallas.1} parent=11 // pred_check_branch
        %223 = sbr.rel (%p221) target = $region36
      $region35: #{basic_block_pallas.1} parent=11 // pred_region
        _
      $region36: #{basic_block_pallas.1} parent=11 // pred_fallthru
        _
    $region12: #{basic_block_pallas.1} parent=5 // pred_fallthru
      _
    %p224 = scmp.lt.s32.totalorder %s13, 2
    // Predicated region
    $region37: #{basic_block_pallas.1} parent=5 // pred_check
      %p225 = pneg %p224
    $region38: #{basic_block_pallas.1} parent=5 // pred_check_branch
      %227 = sbr.rel (%p225) target = $region40
    $region39: #{basic_block_pallas.1} parent=5 // pred_region
      // Predicated region
      $region41: #{basic_block_pallas.1} parent=39 // pred_check
        %p228 = pneg %p33
      $region42: #{basic_block_pallas.1} parent=39 // pred_check_branch
        %230 = sbr.rel (%p228) target = $region44
      $region43: #{basic_block_pallas.1} parent=39 // pred_region
        %s231 = smul.u32 8, %s13
        %p232 = scmp.lt.s32.totalorder %s231, 15
        %s233 = scalar_select %p232, %s231, 15
        %s234 = smul.addr %s233, 2
        %s235 = smul.addr %s234, 8
        %s236 = scalar_lea.vmem %s0, %s235
        %s237 = smul.u32 8, %s13
      $region44: #{basic_block_pallas.1} parent=39 // pred_fallthru
        _
    $region40: #{basic_block_pallas.1} parent=5 // pred_fallthru
      _
    %p238 = scmp.le.s32.totalorder 1, %s13
    %p239 = scmp.lt.s32.totalorder %s13, 3
    %p240 = pnand %p238, %p239
    %p241 = pneg %p240
    // Predicated region
    $region45: #{basic_block_pallas.1} parent=5 // pred_check
      _
    $region46: #{basic_block_pallas.1} parent=5 // pred_check_branch
      %243 = sbr.rel (%p240) target = $region48
    $region47: #{basic_block_pallas.1} parent=5 // pred_region
      %s244 = ssub.s32 %s13, 1
      %s245 = smul.u32 8, %s18
      %p246 = scmp.lt.s32.totalorder %s245, 15
      %s247 = scalar_select %p246, %s245, 15
      %s248 = smul.addr %s247, 2
      %s249 = smul.addr %s248, 8
      %s250 = scalar_lea.vmem %s0, %s249
      %p251 = pneg %p39
      %p252 = pneg %p36
      %p253 = pneg %p60
      %p254 = pneg %p57
      %p255 = pneg %p81
      %p256 = pneg %p78
      %p257 = pneg %p102
      %p258 = pneg %p99
      %p259 = pneg %p123
      %p260 = pneg %p120
      %p261 = pneg %p144
      %p262 = pneg %p141
      %p263 = pneg %p165
      %p264 = pneg %p162
      %p265 = pneg %p191
      %p266 = pneg %p188
      %s267 = smul.u32 8, %s18
      %p268 = scmp.lt.s32.totalorder %s267, 15
      %s269 = scalar_select %p268, %s267, 15
      %s270 = smul.addr %s269, 2
      %s271 = smul.addr %s270, 8
      %s272 = scalar_lea.vmem %s7, %s271
      %s273 = smul.u32 8, %s18
      %p274 = scmp.lt.s32.totalorder %s273, 15
      %s275 = scalar_select %p274, %s273, 15
      %s276 = smul.addr %s275, 2
      %s277 = smul.addr %s276, 8
      %s278 = scalar_lea.vmem %s0, %s277
      %s279 = smul.u32 8, %s18
      %s280 = smul.u32 8, %s18
      %p281 = scmp.lt.s32.totalorder %s280, 15
      %s282 = scalar_select %p281, %s280, 15
      %s283 = smul.addr %s282, 2
      %s284 = smul.addr %s283, 8
      %s285 = scalar_lea.vmem %s7, %s284
      %s286 = smul.u32 8, %s18
      %v287 = vlaneseq
      %v288 = vshrl.u32 %v287, 7
      %v289 = vadd.s32 %v288, 8
      %v290 = vadd.s32 %v288, 16
      %v291 = vadd.s32 %v288, 24
      %v292 = vadd.s32 %v288, 32
      %v293 = vadd.s32 %v288, 40
      %v294 = vadd.s32 %v288, 48
      %v295 = vadd.s32 %v288, 56
      %v296 = vadd.s32 %v288, 64
      %v297 = vadd.s32 %v288, 72
      %v298 = vadd.s32 %v288, 80
      %v299 = vadd.s32 %v288, 88
      %v300 = vadd.s32 %v288, 96
      %v301 = vadd.s32 %v288, 104
      %v302 = vadd.s32 %v288, 112
      %v303 = vadd.s32 %v288, 120
      %vm304 = vcmp.lt.s32.totalorder %v288, 0
      %v305 = vsub.s32 0, %v288
      %v306 = vsel %vm304, %v305, %v288
      %v307 = vshrl.u32 %v306, 4
      %v308 = vand.u32 %v306, 15
      %v309 = vsub.s32 0, %v308
      %v310 = vsel %vm304, %v309, %v308
      %vm311 = vcmp.lt.s32.totalorder %v289, 0
      %v312 = vsub.s32 0, %v289
      %v313 = vsel %vm311, %v312, %v289
      %v314 = vshrl.u32 %v313, 4
      %v315 = vand.u32 %v313, 15
      %v316 = vsub.s32 0, %v315
      %v317 = vsel %vm311, %v316, %v315
      %vm318 = vcmp.lt.s32.totalorder %v290, 0
      %v319 = vsub.s32 0, %v290
      %v320 = vsel %vm318, %v319, %v290
      %v321 = vshrl.u32 %v320, 4
      %v322 = vand.u32 %v320, 15
      %v323 = vsub.s32 0, %v322
      %v324 = vsel %vm318, %v323, %v322
      %vm325 = vcmp.lt.s32.totalorder %v291, 0
      %v326 = vsub.s32 0, %v291
      %v327 = vsel %vm325, %v326, %v291
      %v328 = vshrl.u32 %v327, 4
      %v329 = vand.u32 %v327, 15
      %v330 = vsub.s32 0, %v329
      %v331 = vsel %vm325, %v330, %v329
      %vm332 = vcmp.lt.s32.totalorder %v292, 0
      %v333 = vsub.s32 0, %v292
      %v334 = vsel %vm332, %v333, %v292
      %v335 = vshrl.u32 %v334, 4
      %v336 = vand.u32 %v334, 15
      %v337 = vsub.s32 0, %v336
      %v338 = vsel %vm332, %v337, %v336
      %vm339 = vcmp.lt.s32.totalorder %v293, 0
      %v340 = vsub.s32 0, %v293
      %v341 = vsel %vm339, %v340, %v293
      %v342 = vshrl.u32 %v341, 4
      %v343 = vand.u32 %v341, 15
      %v344 = vsub.s32 0, %v343
      %v345 = vsel %vm339, %v344, %v343
      %vm346 = vcmp.lt.s32.totalorder %v294, 0
      %v347 = vsub.s32 0, %v294
      %v348 = vsel %vm346, %v347, %v294
      %v349 = vshrl.u32 %v348, 4
      %v350 = vand.u32 %v348, 15
      %v351 = vsub.s32 0, %v350
      %v352 = vsel %vm346, %v351, %v350
      %vm353 = vcmp.lt.s32.totalorder %v295, 0
      %v354 = vsub.s32 0, %v295
      %v355 = vsel %vm353, %v354, %v295
      %v356 = vshrl.u32 %v355, 4
      %v357 = vand.u32 %v355, 15
      %v358 = vsub.s32 0, %v357
      %v359 = vsel %vm353, %v358, %v357
      %vm360 = vcmp.lt.s32.totalorder %v296, 0
      %v361 = vsub.s32 0, %v296
      %v362 = vsel %vm360, %v361, %v296
      %v363 = vshrl.u32 %v362, 4
      %v364 = vand.u32 %v362, 15
      %v365 = vsub.s32 0, %v364
      %v366 = vsel %vm360, %v365, %v364
      %vm367 = vcmp.lt.s32.totalorder %v297, 0
      %v368 = vsub.s32 0, %v297
      %v369 = vsel %vm367, %v368, %v297
      %v370 = vshrl.u32 %v369, 4
      %v371 = vand.u32 %v369, 15
      %v372 = vsub.s32 0, %v371
      %v373 = vsel %vm367, %v372, %v371
      %vm374 = vcmp.lt.s32.totalorder %v298, 0
      %v375 = vsub.s32 0, %v298
      %v376 = vsel %vm374, %v375, %v298
      %v377 = vshrl.u32 %v376, 4
      %v378 = vand.u32 %v376, 15
      %v379 = vsub.s32 0, %v378
      %v380 = vsel %vm374, %v379, %v378
      %vm381 = vcmp.lt.s32.totalorder %v299, 0
      %v382 = vsub.s32 0, %v299
      %v383 = vsel %vm381, %v382, %v299
      %v384 = vshrl.u32 %v383, 4
      %v385 = vand.u32 %v383, 15
      %v386 = vsub.s32 0, %v385
      %v387 = vsel %vm381, %v386, %v385
      %vm388 = vcmp.lt.s32.totalorder %v300, 0
      %v389 = vsub.s32 0, %v300
      %v390 = vsel %vm388, %v389, %v300
      %v391 = vshrl.u32 %v390, 4
      %v392 = vand.u32 %v390, 15
      %v393 = vsub.s32 0, %v392
      %v394 = vsel %vm388, %v393, %v392
      %vm395 = vcmp.lt.s32.totalorder %v301, 0
      %v396 = vsub.s32 0, %v301
      %v397 = vsel %vm395, %v396, %v301
      %v398 = vshrl.u32 %v397, 4
      %v399 = vand.u32 %v397, 15
      %v400 = vsub.s32 0, %v399
      %v401 = vsel %vm395, %v400, %v399
      %vm402 = vcmp.lt.s32.totalorder %v302, 0
      %v403 = vsub.s32 0, %v302
      %v404 = vsel %vm402, %v403, %v302
      %v405 = vshrl.u32 %v404, 4
      %v406 = vand.u32 %v404, 15
      %v407 = vsub.s32 0, %v406
      %v408 = vsel %vm402, %v407, %v406
      %vm409 = vcmp.lt.s32.totalorder %v303, 0
      %v410 = vsub.s32 0, %v303
      %v411 = vsel %vm409, %v410, %v303
      %v412 = vshrl.u32 %v411, 4
      %v413 = vand.u32 %v411, 15
      %v414 = vsub.s32 0, %v413
      %v415 = vsel %vm409, %v414, %v413
      %vm416 = vcmp.ne.s32.totalorder %v310, 0
      %vm417 = vcmp.ne.s32.totalorder %v317, 0
      %vm418 = vcmp.ne.s32.totalorder %v324, 0
      %vm419 = vcmp.ne.s32.totalorder %v331, 0
      %vm420 = vcmp.ne.s32.totalorder %v338, 0
      %vm421 = vcmp.ne.s32.totalorder %v345, 0
      %vm422 = vcmp.ne.s32.totalorder %v352, 0
      %vm423 = vcmp.ne.s32.totalorder %v359, 0
      %vm424 = vcmp.ne.s32.totalorder %v366, 0
      %vm425 = vcmp.ne.s32.totalorder %v373, 0
      %vm426 = vcmp.ne.s32.totalorder %v380, 0
      %vm427 = vcmp.ne.s32.totalorder %v387, 0
      %vm428 = vcmp.ne.s32.totalorder %v394, 0
      %vm429 = vcmp.ne.s32.totalorder %v401, 0
      %vm430 = vcmp.ne.s32.totalorder %v408, 0
      %vm431 = vcmp.ne.s32.totalorder %v415, 0
      %vm432 = vcmp.lt.s32.totalorder %v310, 0
      %vm433 = vcmp.lt.s32.totalorder %v317, 0
      %vm434 = vcmp.lt.s32.totalorder %v324, 0
      %vm435 = vcmp.lt.s32.totalorder %v331, 0
      %vm436 = vcmp.lt.s32.totalorder %v338, 0
      %vm437 = vcmp.lt.s32.totalorder %v345, 0
      %vm438 = vcmp.lt.s32.totalorder %v352, 0
      %vm439 = vcmp.lt.s32.totalorder %v359, 0
      %vm440 = vcmp.lt.s32.totalorder %v366, 0
      %vm441 = vcmp.lt.s32.totalorder %v373, 0
      %vm442 = vcmp.lt.s32.totalorder %v380, 0
      %vm443 = vcmp.lt.s32.totalorder %v387, 0
      %vm444 = vcmp.lt.s32.totalorder %v394, 0
      %vm445 = vcmp.lt.s32.totalorder %v401, 0
      %vm446 = vcmp.lt.s32.totalorder %v408, 0
      %vm447 = vcmp.lt.s32.totalorder %v415, 0
      %vm448 = vmand %vm432, %vm416
      %vm449 = vmand %vm433, %vm417
      %vm450 = vmand %vm434, %vm418
      %vm451 = vmand %vm435, %vm419
      %vm452 = vmand %vm436, %vm420
      %vm453 = vmand %vm437, %vm421
      %vm454 = vmand %vm438, %vm422
      %vm455 = vmand %vm439, %vm423
      %vm456 = vmand %vm440, %vm424
      %vm457 = vmand %vm441, %vm425
      %vm458 = vmand %vm442, %vm426
      %vm459 = vmand %vm443, %vm427
      %vm460 = vmand %vm444, %vm428
      %vm461 = vmand %vm445, %vm429
      %vm462 = vmand %vm446, %vm430
      %vm463 = vmand %vm447, %vm431
      %v464 = vadd.s32 %v310, 16
      %v465 = vadd.s32 %v317, 16
      %v466 = vadd.s32 %v324, 16
      %v467 = vadd.s32 %v331, 16
      %v468 = vadd.s32 %v338, 16
      %v469 = vadd.s32 %v345, 16
      %v470 = vadd.s32 %v352, 16
      %v471 = vadd.s32 %v359, 16
      %v472 = vadd.s32 %v366, 16
      %v473 = vadd.s32 %v373, 16
      %v474 = vadd.s32 %v380, 16
      %v475 = vadd.s32 %v387, 16
      %v476 = vadd.s32 %v394, 16
      %v477 = vadd.s32 %v401, 16
      %v478 = vadd.s32 %v408, 16
      %v479 = vadd.s32 %v415, 16
      %v480 = vsel %vm448, %v464, %v310
      %v481 = vsel %vm449, %v465, %v317
      %v482 = vsel %vm450, %v466, %v324
      %v483 = vsel %vm451, %v467, %v331
      %v484 = vsel %vm452, %v468, %v338
      %v485 = vsel %vm453, %v469, %v345
      %v486 = vsel %vm454, %v470, %v352
      %v487 = vsel %vm455, %v471, %v359
      %v488 = vsel %vm456, %v472, %v366
      %v489 = vsel %vm457, %v473, %v373
      %v490 = vsel %vm458, %v474, %v380
      %v491 = vsel %vm459, %v475, %v387
      %v492 = vsel %vm460, %v476, %v394
      %v493 = vsel %vm461, %v477, %v401
      %v494 = vsel %vm462, %v478, %v408
      %v495 = vsel %vm463, %v479, %v415
      %vm496 = vcmp.ne.s32.totalorder %v480, 0
      %vm497 = vcmp.ne.s32.totalorder %v481, 0
      %vm498 = vcmp.ne.s32.totalorder %v482, 0
      %vm499 = vcmp.ne.s32.totalorder %v483, 0
      %vm500 = vcmp.ne.s32.totalorder %v484, 0
      %vm501 = vcmp.ne.s32.totalorder %v485, 0
      %vm502 = vcmp.ne.s32.totalorder %v486, 0
      %vm503 = vcmp.ne.s32.totalorder %v487, 0
      %vm504 = vcmp.ne.s32.totalorder %v488, 0
      %vm505 = vcmp.ne.s32.totalorder %v489, 0
      %vm506 = vcmp.ne.s32.totalorder %v490, 0
      %vm507 = vcmp.ne.s32.totalorder %v491, 0
      %vm508 = vcmp.ne.s32.totalorder %v492, 0
      %vm509 = vcmp.ne.s32.totalorder %v493, 0
      %vm510 = vcmp.ne.s32.totalorder %v494, 0
      %vm511 = vcmp.ne.s32.totalorder %v495, 0
      %vm512 = vcmp.ne.s32.totalorder %v480, 15
      %vm513 = vcmp.ne.s32.totalorder %v481, 15
      %vm514 = vcmp.ne.s32.totalorder %v482, 15
      %vm515 = vcmp.ne.s32.totalorder %v483, 15
      %vm516 = vcmp.ne.s32.totalorder %v484, 15
      %vm517 = vcmp.ne.s32.totalorder %v485, 15
      %vm518 = vcmp.ne.s32.totalorder %v486, 15
      %vm519 = vcmp.ne.s32.totalorder %v487, 15
      %vm520 = vcmp.ne.s32.totalorder %v488, 15
      %vm521 = vcmp.ne.s32.totalorder %v489, 15
      %vm522 = vcmp.ne.s32.totalorder %v490, 15
      %vm523 = vcmp.ne.s32.totalorder %v491, 15
      %vm524 = vcmp.ne.s32.totalorder %v492, 15
      %vm525 = vcmp.ne.s32.totalorder %v493, 15
      %vm526 = vcmp.ne.s32.totalorder %v494, 15
      %vm527 = vcmp.ne.s32.totalorder %v495, 15
      %v528 = vld [vmem:[%s278] sm:$0xff]
      %v529 = vld [vmem:[%s278 + $0x8] sm:$0xff]
      %v530 = vld [vmem:[%s278 + $0x10] sm:$0xff]
      %v531 = vld [vmem:[%s278 + $0x18] sm:$0xff]
      %v532 = vld [vmem:[%s278 + $0x20] sm:$0xff]
      %v533 = vld [vmem:[%s278 + $0x28] sm:$0xff]
      %v534 = vld [vmem:[%s278 + $0x30] sm:$0xff]
      %v535 = vld [vmem:[%s278 + $0x38] sm:$0xff]
      %v536 = vld [vmem:[%s278 + $0x40] sm:$0xff]
      %v537 = vld [vmem:[%s278 + $0x48] sm:$0xff]
      %v538 = vld [vmem:[%s278 + $0x50] sm:$0xff]
      %v539 = vld [vmem:[%s278 + $0x58] sm:$0xff]
      %v540 = vld [vmem:[%s278 + $0x60] sm:$0xff]
      %v541 = vld [vmem:[%s278 + $0x68] sm:$0xff]
      %v542 = vld [vmem:[%s278 + $0x70] sm:$0xff]
      %v543 = vld [vmem:[%s278 + $0x78] sm:$0xff]
      %v544 = vld [vmem:[%s1] sm:$0x1]
      %v546 = vperm.slane %v544, 0
      %v548 = vmul.f32 %v528, %v546
      %v549 = vmul.f32 %v529, %v546
      %v550 = vmul.f32 %v530, %v546
      %v551 = vmul.f32 %v531, %v546
      %v552 = vmul.f32 %v532, %v546
      %v553 = vmul.f32 %v533, %v546
      %v554 = vmul.f32 %v534, %v546
      %v555 = vmul.f32 %v535, %v546
      %v556 = vmul.f32 %v536, %v546
      %v557 = vmul.f32 %v537, %v546
      %v558 = vmul.f32 %v538, %v546
      %v559 = vmul.f32 %v539, %v546
      %v560 = vmul.f32 %v540, %v546
      %v561 = vmul.f32 %v541, %v546
      %v562 = vmul.f32 %v542, %v546
      %v563 = vmul.f32 %v543, %v546
      %v564 = vld [vmem:[%s2] sm:$0x1]
      %v566 = vperm.slane %v564, 0
      %v568 = vadd.f32 %v548, %v566
      %v569 = vadd.f32 %v549, %v566
      %v570 = vadd.f32 %v550, %v566
      %v571 = vadd.f32 %v551, %v566
      %v572 = vadd.f32 %v552, %v566
      %v573 = vadd.f32 %v553, %v566
      %v574 = vadd.f32 %v554, %v566
      %v575 = vadd.f32 %v555, %v566
      %v576 = vadd.f32 %v556, %v566
      %v577 = vadd.f32 %v557, %v566
      %v578 = vadd.f32 %v558, %v566
      %v579 = vadd.f32 %v559, %v566
      %v580 = vadd.f32 %v560, %v566
      %v581 = vadd.f32 %v561, %v566
      %v582 = vadd.f32 %v562, %v566
      %v583 = vadd.f32 %v563, %v566
      %v584 = vmax.f32 %v568, 0.0
      %v585 = vmax.f32 %v569, 0.0
      %v586 = vmax.f32 %v570, 0.0
      %v587 = vmax.f32 %v571, 0.0
      %v588 = vmax.f32 %v572, 0.0
      %v589 = vmax.f32 %v573, 0.0
      %v590 = vmax.f32 %v574, 0.0
      %v591 = vmax.f32 %v575, 0.0
      %v592 = vmax.f32 %v576, 0.0
      %v593 = vmax.f32 %v577, 0.0
      %v594 = vmax.f32 %v578, 0.0
      %v595 = vmax.f32 %v579, 0.0
      %v596 = vmax.f32 %v580, 0.0
      %v597 = vmax.f32 %v581, 0.0
      %v598 = vmax.f32 %v582, 0.0
      %v599 = vmax.f32 %v583, 0.0
      %v600 = vrot.slane %v584, 7
      %v601 = vrot.slane %v585, 7
      %v602 = vrot.slane %v586, 7
      %v603 = vrot.slane %v587, 7
      %v604 = vrot.slane %v588, 7
      %v605 = vrot.slane %v589, 7
      %v606 = vrot.slane %v590, 7
      %v607 = vrot.slane %v591, 7
      %v608 = vrot.slane %v592, 7
      %v609 = vrot.slane %v593, 7
      %v610 = vrot.slane %v594, 7
      %v611 = vrot.slane %v595, 7
      %v612 = vrot.slane %v596, 7
      %v613 = vrot.slane %v597, 7
      %v614 = vrot.slane %v598, 7
      %v615 = vrot.slane %v599, 7
      %vm616 = vcmp.lt.s32.totalorder %v288, 1
      %v617 = vsel %vm616, %v614, %v615
      %v618 = vsel %vm616, %v613, %v614
      %v619 = vsel %vm616, %v612, %v613
      %v620 = vsel %vm616, %v611, %v612
      %v621 = vsel %vm616, %v610, %v611
      %v622 = vsel %vm616, %v609, %v610
      %v623 = vsel %vm616, %v608, %v609
      %v624 = vsel %vm616, %v607, %v608
      %v625 = vsel %vm616, %v606, %v607
      %v626 = vsel %vm616, %v605, %v606
      %v627 = vsel %vm616, %v604, %v605
      %v628 = vsel %vm616, %v603, %v604
      %v629 = vsel %vm616, %v602, %v603
      %v630 = vsel %vm616, %v601, %v602
      %v631 = vsel %vm616, %v600, %v601
      %v632 = vsel %vm616, %v615, %v600
      %v633 = vsel %vm496, %v632, 0.0
      %v634 = vsel %vm497, %v631, 0.0
      %v635 = vsel %vm498, %v630, 0.0
      %v636 = vsel %vm499, %v629, 0.0
      %v637 = vsel %vm500, %v628, 0.0
      %v638 = vsel %vm501, %v627, 0.0
      %v639 = vsel %vm502, %v626, 0.0
      %v640 = vsel %vm503, %v625, 0.0
      %v641 = vsel %vm504, %v624, 0.0
      %v642 = vsel %vm505, %v623, 0.0
      %v643 = vsel %vm506, %v622, 0.0
      %v644 = vsel %vm507, %v621, 0.0
      %v645 = vsel %vm508, %v620, 0.0
      %v646 = vsel %vm509, %v619, 0.0
      %v647 = vsel %vm510, %v618, 0.0
      %v648 = vsel %vm511, %v617, 0.0
      %v649 = vrot.slane %v584, 1
      %v650 = vrot.slane %v585, 1
      %v651 = vrot.slane %v586, 1
      %v652 = vrot.slane %v587, 1
      %v653 = vrot.slane %v588, 1
      %v654 = vrot.slane %v589, 1
      %v655 = vrot.slane %v590, 1
      %v656 = vrot.slane %v591, 1
      %v657 = vrot.slane %v592, 1
      %v658 = vrot.slane %v593, 1
      %v659 = vrot.slane %v594, 1
      %v660 = vrot.slane %v595, 1
      %v661 = vrot.slane %v596, 1
      %v662 = vrot.slane %v597, 1
      %v663 = vrot.slane %v598, 1
      %v664 = vrot.slane %v599, 1
      %vm665 = vcmp.lt.s32.totalorder %v288, 7
      %v666 = vsel %vm665, %v663, %v664
      %v667 = vsel %vm665, %v662, %v663
      %v668 = vsel %vm665, %v661, %v662
      %v669 = vsel %vm665, %v660, %v661
      %v670 = vsel %vm665, %v659, %v660
      %v671 = vsel %vm665, %v658, %v659
      %v672 = vsel %vm665, %v657, %v658
      %v673 = vsel %vm665, %v656, %v657
      %v674 = vsel %vm665, %v655, %v656
      %v675 = vsel %vm665, %v654, %v655
      %v676 = vsel %vm665, %v653, %v654
      %v677 = vsel %vm665, %v652, %v653
      %v678 = vsel %vm665, %v651, %v652
      %v679 = vsel %vm665, %v650, %v651
      %v680 = vsel %vm665, %v649, %v650
      %v681 = vsel %vm665, %v664, %v649
      %v682 = vsel %vm512, %v680, 0.0
      %v683 = vsel %vm513, %v679, 0.0
      %v684 = vsel %vm514, %v678, 0.0
      %v685 = vsel %vm515, %v677, 0.0
      %v686 = vsel %vm516, %v676, 0.0
      %v687 = vsel %vm517, %v675, 0.0
      %v688 = vsel %vm518, %v674, 0.0
      %v689 = vsel %vm519, %v673, 0.0
      %v690 = vsel %vm520, %v672, 0.0
      %v691 = vsel %vm521, %v671, 0.0
      %v692 = vsel %vm522, %v670, 0.0
      %v693 = vsel %vm523, %v669, 0.0
      %v694 = vsel %vm524, %v668, 0.0
      %v695 = vsel %vm525, %v667, 0.0
      %v696 = vsel %vm526, %v666, 0.0
      %v697 = vsel %vm527, %v681, 0.0
      %v698 = vld [vmem:[%s3] sm:$0xff]
      %v699 = vld [vmem:[%s3 + $0x8] sm:$0xff]
      %v700 = vld [vmem:[%s3 + $0x10] sm:$0xff]
      %v701 = vld [vmem:[%s3 + $0x18] sm:$0xff]
      %v702 = vld [vmem:[%s3 + $0x20] sm:$0xff]
      %v703 = vld [vmem:[%s3 + $0x28] sm:$0xff]
      %v704 = vld [vmem:[%s3 + $0x30] sm:$0xff]
      %v705 = vld [vmem:[%s3 + $0x38] sm:$0xff]
      %v706 = vld [vmem:[%s3 + $0x40] sm:$0xff]
      %v707 = vld [vmem:[%s3 + $0x48] sm:$0xff]
      %v708 = vld [vmem:[%s3 + $0x50] sm:$0xff]
      %v709 = vld [vmem:[%s3 + $0x58] sm:$0xff]
      %v710 = vld [vmem:[%s3 + $0x60] sm:$0xff]
      %v711 = vld [vmem:[%s3 + $0x68] sm:$0xff]
      %v712 = vld [vmem:[%s3 + $0x70] sm:$0xff]
      %v713 = vld [vmem:[%s3 + $0x78] sm:$0xff]
      %v714 = vld [vmem:[%s3 + $0x80] sm:$0xff]
      %v715 = vld [vmem:[%s3 + $0x88] sm:$0xff]
      %v716 = vld [vmem:[%s3 + $0x90] sm:$0xff]
      %v717 = vld [vmem:[%s3 + $0x98] sm:$0xff]
      %v718 = vld [vmem:[%s3 + $0xa0] sm:$0xff]
      %v719 = vld [vmem:[%s3 + $0xa8] sm:$0xff]
      %v720 = vld [vmem:[%s3 + $0xb0] sm:$0xff]
      %v721 = vld [vmem:[%s3 + $0xb8] sm:$0xff]
      %v722 = vld [vmem:[%s3 + $0xc0] sm:$0xff]
      %v723 = vld [vmem:[%s3 + $0xc8] sm:$0xff]
      %v724 = vld [vmem:[%s3 + $0xd0] sm:$0xff]
      %v725 = vld [vmem:[%s3 + $0xd8] sm:$0xff]
      %v726 = vld [vmem:[%s3 + $0xe0] sm:$0xff]
      %v727 = vld [vmem:[%s3 + $0xe8] sm:$0xff]
      %v728 = vld [vmem:[%s3 + $0xf0] sm:$0xff]
      %v729 = vld [vmem:[%s3 + $0xf8] sm:$0xff]
      %v730 = vld [vmem:[%s3 + $0x100] sm:$0xff]
      %v731 = vld [vmem:[%s3 + $0x108] sm:$0xff]
      %v732 = vld [vmem:[%s3 + $0x110] sm:$0xff]
      %v733 = vld [vmem:[%s3 + $0x118] sm:$0xff]
      %v734 = vld [vmem:[%s3 + $0x120] sm:$0xff]
      %v735 = vld [vmem:[%s3 + $0x128] sm:$0xff]
      %v736 = vld [vmem:[%s3 + $0x130] sm:$0xff]
      %v737 = vld [vmem:[%s3 + $0x138] sm:$0xff]
      %v738 = vld [vmem:[%s3 + $0x140] sm:$0xff]
      %v739 = vld [vmem:[%s3 + $0x148] sm:$0xff]
      %v740 = vld [vmem:[%s3 + $0x150] sm:$0xff]
      %v741 = vld [vmem:[%s3 + $0x158] sm:$0xff]
      %v742 = vld [vmem:[%s3 + $0x160] sm:$0xff]
      %v743 = vld [vmem:[%s3 + $0x168] sm:$0xff]
      %v744 = vld [vmem:[%s3 + $0x170] sm:$0xff]
      %v745 = vld [vmem:[%s3 + $0x178] sm:$0xff]
      %746 = vmatpush.msra.mxu0 %v713
      %747 = vmatpush.msra.mxu0 %v712
      %748 = vmatpush.msra.mxu0 %v711
      %749 = vmatpush.msra.mxu0 %v710
      %750 = vmatpush.msra.mxu0 %v709
      %751 = vmatpush.msra.mxu0 %v708
      %752 = vmatpush.msra.mxu0 %v707
      %753 = vmatpush.msra.mxu0 %v706
      %754 = vmatpush.msra.mxu0 %v705
      %755 = vmatpush.msra.mxu0 %v704
      %756 = vmatpush.msra.mxu0 %v703
      %757 = vmatpush.msra.mxu0 %v702
      %758 = vmatpush.msra.mxu0 %v701
      %759 = vmatpush.msra.mxu0 %v700
      %760 = vmatpush.msra.mxu0 %v699
      %761 = vmatpush.msra.mxu0 %v698
      %762 = vmatmul.f32.gmra.mxu0 %v633
      %v763 = vpop.f32.mrf.mxu0
      %v764 = vadd.f32 0.0, %v763
      %765 = vmatmul.f32.gmra.mxu0 %v634
      %v766 = vpop.f32.mrf.mxu0
      %v767 = vadd.f32 0.0, %v766
      %768 = vmatmul.f32.gmra.mxu0 %v635
      %v769 = vpop.f32.mrf.mxu0
      %v770 = vadd.f32 0.0, %v769
      %771 = vmatmul.f32.gmra.mxu0 %v636
      %v772 = vpop.f32.mrf.mxu0
      %v773 = vadd.f32 0.0, %v772
      %774 = vmatmul.f32.gmra.mxu0 %v637
      %v775 = vpop.f32.mrf.mxu0
      %v776 = vadd.f32 0.0, %v775
      %777 = vmatmul.f32.gmra.mxu0 %v638
      %v778 = vpop.f32.mrf.mxu0
      %v779 = vadd.f32 0.0, %v778
      %780 = vmatmul.f32.gmra.mxu0 %v639
      %v781 = vpop.f32.mrf.mxu0
      %v782 = vadd.f32 0.0, %v781
      %783 = vmatmul.f32.gmra.mxu0 %v640
      %v784 = vpop.f32.mrf.mxu0
      %v785 = vadd.f32 0.0, %v784
      %786 = vmatmul.f32.gmra.mxu0 %v641
      %v787 = vpop.f32.mrf.mxu0
      %v788 = vadd.f32 0.0, %v787
      %789 = vmatmul.f32.gmra.mxu0 %v642
      %v790 = vpop.f32.mrf.mxu0
      %v791 = vadd.f32 0.0, %v790
      %792 = vmatmul.f32.gmra.mxu0 %v643
      %v793 = vpop.f32.mrf.mxu0
      %v794 = vadd.f32 0.0, %v793
      %795 = vmatmul.f32.gmra.mxu0 %v644
      %v796 = vpop.f32.mrf.mxu0
      %v797 = vadd.f32 0.0, %v796
      %798 = vmatmul.f32.gmra.mxu0 %v645
      %v799 = vpop.f32.mrf.mxu0
      %v800 = vadd.f32 0.0, %v799
      %801 = vmatmul.f32.gmra.mxu0 %v646
      %v802 = vpop.f32.mrf.mxu0
      %v803 = vadd.f32 0.0, %v802
      %804 = vmatmul.f32.gmra.mxu0 %v647
      %v805 = vpop.f32.mrf.mxu0
      %v806 = vadd.f32 0.0, %v805
      %807 = vmatmul.f32.gmra.mxu0 %v648
      %v808 = vpop.f32.mrf.mxu0
      %v809 = vadd.f32 0.0, %v808
      %810 = vdwg.mxu0
      %811 = vmatpush.msra.mxu0 %v729
      %812 = vmatpush.msra.mxu0 %v728
      %813 = vmatpush.msra.mxu0 %v727
      %814 = vmatpush.msra.mxu0 %v726
      %815 = vmatpush.msra.mxu0 %v725
      %816 = vmatpush.msra.mxu0 %v724
      %817 = vmatpush.msra.mxu0 %v723
      %818 = vmatpush.msra.mxu0 %v722
      %819 = vmatpush.msra.mxu0 %v721
      %820 = vmatpush.msra.mxu0 %v720
      %821 = vmatpush.msra.mxu0 %v719
      %822 = vmatpush.msra.mxu0 %v718
      %823 = vmatpush.msra.mxu0 %v717
      %824 = vmatpush.msra.mxu0 %v716
      %825 = vmatpush.msra.mxu0 %v715
      %826 = vmatpush.msra.mxu0 %v714
      %827 = vmatmul.f32.gmra.mxu0 %v584
      %v828 = vpop.f32.mrf.mxu0
      %v829 = vadd.f32 %v764, %v828
      %830 = vmatmul.f32.gmra.mxu0 %v585
      %v831 = vpop.f32.mrf.mxu0
      %v832 = vadd.f32 %v767, %v831
      %833 = vmatmul.f32.gmra.mxu0 %v586
      %v834 = vpop.f32.mrf.mxu0
      %v835 = vadd.f32 %v770, %v834
      %836 = vmatmul.f32.gmra.mxu0 %v587
      %v837 = vpop.f32.mrf.mxu0
      %v838 = vadd.f32 %v773, %v837
      %839 = vmatmul.f32.gmra.mxu0 %v588
      %v840 = vpop.f32.mrf.mxu0
      %v841 = vadd.f32 %v776, %v840
      %842 = vmatmul.f32.gmra.mxu0 %v589
      %v843 = vpop.f32.mrf.mxu0
      %v844 = vadd.f32 %v779, %v843
      %845 = vmatmul.f32.gmra.mxu0 %v590
      %v846 = vpop.f32.mrf.mxu0
      %v847 = vadd.f32 %v782, %v846
      %848 = vmatmul.f32.gmra.mxu0 %v591
      %v849 = vpop.f32.mrf.mxu0
      %v850 = vadd.f32 %v785, %v849
      %851 = vmatmul.f32.gmra.mxu0 %v592
      %v852 = vpop.f32.mrf.mxu0
      %v853 = vadd.f32 %v788, %v852
      %854 = vmatmul.f32.gmra.mxu0 %v593
      %v855 = vpop.f32.mrf.mxu0
      %v856 = vadd.f32 %v791, %v855
      %857 = vmatmul.f32.gmra.mxu0 %v594
      %v858 = vpop.f32.mrf.mxu0
      %v859 = vadd.f32 %v794, %v858
      %860 = vmatmul.f32.gmra.mxu0 %v595
      %v861 = vpop.f32.mrf.mxu0
      %v862 = vadd.f32 %v797, %v861
      %863 = vmatmul.f32.gmra.mxu0 %v596
      %v864 = vpop.f32.mrf.mxu0
      %v865 = vadd.f32 %v800, %v864
      %866 = vmatmul.f32.gmra.mxu0 %v597
      %v867 = vpop.f32.mrf.mxu0
      %v868 = vadd.f32 %v803, %v867
      %869 = vmatmul.f32.gmra.mxu0 %v598
      %v870 = vpop.f32.mrf.mxu0
      %v871 = vadd.f32 %v806, %v870
      %872 = vmatmul.f32.gmra.mxu0 %v599
      %v873 = vpop.f32.mrf.mxu0
      %v874 = vadd.f32 %v809, %v873
      %875 = vdwg.mxu0
      %876 = vmatpush.msra.mxu0 %v745
      %877 = vmatpush.msra.mxu0 %v744
      %878 = vmatpush.msra.mxu0 %v743
      %879 = vmatpush.msra.mxu0 %v742
      %880 = vmatpush.msra.mxu0 %v741
      %881 = vmatpush.msra.mxu0 %v740
      %882 = vmatpush.msra.mxu0 %v739
      %883 = vmatpush.msra.mxu0 %v738
      %884 = vmatpush.msra.mxu0 %v737
      %885 = vmatpush.msra.mxu0 %v736
      %886 = vmatpush.msra.mxu0 %v735
      %887 = vmatpush.msra.mxu0 %v734
      %888 = vmatpush.msra.mxu0 %v733
      %889 = vmatpush.msra.mxu0 %v732
      %890 = vmatpush.msra.mxu0 %v731
      %891 = vmatpush.msra.mxu0 %v730
      %892 = vmatmul.f32.gmra.mxu0 %v682
      %v893 = vpop.f32.mrf.mxu0
      %v894 = vadd.f32 %v829, %v893
      %895 = vmatmul.f32.gmra.mxu0 %v683
      %v896 = vpop.f32.mrf.mxu0
      %v897 = vadd.f32 %v832, %v896
      %898 = vmatmul.f32.gmra.mxu0 %v684
      %v899 = vpop.f32.mrf.mxu0
      %v900 = vadd.f32 %v835, %v899
      %901 = vmatmul.f32.gmra.mxu0 %v685
      %v902 = vpop.f32.mrf.mxu0
      %v903 = vadd.f32 %v838, %v902
      %904 = vmatmul.f32.gmra.mxu0 %v686
      %v905 = vpop.f32.mrf.mxu0
      %v906 = vadd.f32 %v841, %v905
      %907 = vmatmul.f32.gmra.mxu0 %v687
      %v908 = vpop.f32.mrf.mxu0
      %v909 = vadd.f32 %v844, %v908
      %910 = vmatmul.f32.gmra.mxu0 %v688
      %v911 = vpop.f32.mrf.mxu0
      %v912 = vadd.f32 %v847, %v911
      %913 = vmatmul.f32.gmra.mxu0 %v689
      %v914 = vpop.f32.mrf.mxu0
      %v915 = vadd.f32 %v850, %v914
      %916 = vmatmul.f32.gmra.mxu0 %v690
      %v917 = vpop.f32.mrf.mxu0
      %v918 = vadd.f32 %v853, %v917
      %919 = vmatmul.f32.gmra.mxu0 %v691
      %v920 = vpop.f32.mrf.mxu0
      %v921 = vadd.f32 %v856, %v920
      %922 = vmatmul.f32.gmra.mxu0 %v692
      %v923 = vpop.f32.mrf.mxu0
      %v924 = vadd.f32 %v859, %v923
      %925 = vmatmul.f32.gmra.mxu0 %v693
      %v926 = vpop.f32.mrf.mxu0
      %v927 = vadd.f32 %v862, %v926
      %928 = vmatmul.f32.gmra.mxu0 %v694
      %v929 = vpop.f32.mrf.mxu0
      %v930 = vadd.f32 %v865, %v929
      %931 = vmatmul.f32.gmra.mxu0 %v695
      %v932 = vpop.f32.mrf.mxu0
      %v933 = vadd.f32 %v868, %v932
      %934 = vmatmul.f32.gmra.mxu0 %v696
      %v935 = vpop.f32.mrf.mxu0
      %v936 = vadd.f32 %v871, %v935
      %937 = vmatmul.f32.gmra.mxu0 %v697
      %v938 = vpop.f32.mrf.mxu0
      %v939 = vadd.f32 %v874, %v938
      %940 = vdwg.mxu0
      %v941 = vld [vmem:[%s4] sm:$0x1]
      %v943 = vperm.slane %v941, 0
      %v945 = vmul.f32 %v894, %v943
      %v946 = vmul.f32 %v897, %v943
      %v947 = vmul.f32 %v900, %v943
      %v948 = vmul.f32 %v903, %v943
      %v949 = vmul.f32 %v906, %v943
      %v950 = vmul.f32 %v909, %v943
      %v951 = vmul.f32 %v912, %v943
      %v952 = vmul.f32 %v915, %v943
      %v953 = vmul.f32 %v918, %v943
      %v954 = vmul.f32 %v921, %v943
      %v955 = vmul.f32 %v924, %v943
      %v956 = vmul.f32 %v927, %v943
      %v957 = vmul.f32 %v930, %v943
      %v958 = vmul.f32 %v933, %v943
      %v959 = vmul.f32 %v936, %v943
      %v960 = vmul.f32 %v939, %v943
      %v961 = vld [vmem:[%s5] sm:$0x1]
      %v963 = vperm.slane %v961, 0
      %v965 = vadd.f32 %v945, %v963
      %v966 = vadd.f32 %v946, %v963
      %v967 = vadd.f32 %v947, %v963
      %v968 = vadd.f32 %v948, %v963
      %v969 = vadd.f32 %v949, %v963
      %v970 = vadd.f32 %v950, %v963
      %v971 = vadd.f32 %v951, %v963
      %v972 = vadd.f32 %v952, %v963
      %v973 = vadd.f32 %v953, %v963
      %v974 = vadd.f32 %v954, %v963
      %v975 = vadd.f32 %v955, %v963
      %v976 = vadd.f32 %v956, %v963
      %v977 = vadd.f32 %v957, %v963
      %v978 = vadd.f32 %v958, %v963
      %v979 = vadd.f32 %v959, %v963
      %v980 = vadd.f32 %v960, %v963
      %v981 = vmax.f32 %v965, 0.0
      %v982 = vmax.f32 %v966, 0.0
      %v983 = vmax.f32 %v967, 0.0
      %v984 = vmax.f32 %v968, 0.0
      %v985 = vmax.f32 %v969, 0.0
      %v986 = vmax.f32 %v970, 0.0
      %v987 = vmax.f32 %v971, 0.0
      %v988 = vmax.f32 %v972, 0.0
      %v989 = vmax.f32 %v973, 0.0
      %v990 = vmax.f32 %v974, 0.0
      %v991 = vmax.f32 %v975, 0.0
      %v992 = vmax.f32 %v976, 0.0
      %v993 = vmax.f32 %v977, 0.0
      %v994 = vmax.f32 %v978, 0.0
      %v995 = vmax.f32 %v979, 0.0
      %v996 = vmax.f32 %v980, 0.0
      %v997 = vrot.slane %v981, 7
      %v998 = vrot.slane %v982, 7
      %v999 = vrot.slane %v983, 7
      %v1000 = vrot.slane %v984, 7
      %v1001 = vrot.slane %v985, 7
      %v1002 = vrot.slane %v986, 7
      %v1003 = vrot.slane %v987, 7
      %v1004 = vrot.slane %v988, 7
      %v1005 = vrot.slane %v989, 7
      %v1006 = vrot.slane %v990, 7
      %v1007 = vrot.slane %v991, 7
      %v1008 = vrot.slane %v992, 7
      %v1009 = vrot.slane %v993, 7
      %v1010 = vrot.slane %v994, 7
      %v1011 = vrot.slane %v995, 7
      %v1012 = vrot.slane %v996, 7
      %v1013 = vsel %vm616, %v1011, %v1012
      %v1014 = vsel %vm616, %v1010, %v1011
      %v1015 = vsel %vm616, %v1009, %v1010
      %v1016 = vsel %vm616, %v1008, %v1009
      %v1017 = vsel %vm616, %v1007, %v1008
      %v1018 = vsel %vm616, %v1006, %v1007
      %v1019 = vsel %vm616, %v1005, %v1006
      %v1020 = vsel %vm616, %v1004, %v1005
      %v1021 = vsel %vm616, %v1003, %v1004
      %v1022 = vsel %vm616, %v1002, %v1003
      %v1023 = vsel %vm616, %v1001, %v1002
      %v1024 = vsel %vm616, %v1000, %v1001
      %v1025 = vsel %vm616, %v999, %v1000
      %v1026 = vsel %vm616, %v998, %v999
      %v1027 = vsel %vm616, %v997, %v998
      %v1028 = vsel %vm616, %v1012, %v997
      %v1029 = vsel %vm496, %v1028, 0.0
      %v1030 = vsel %vm497, %v1027, 0.0
      %v1031 = vsel %vm498, %v1026, 0.0
      %v1032 = vsel %vm499, %v1025, 0.0
      %v1033 = vsel %vm500, %v1024, 0.0
      %v1034 = vsel %vm501, %v1023, 0.0
      %v1035 = vsel %vm502, %v1022, 0.0
      %v1036 = vsel %vm503, %v1021, 0.0
      %v1037 = vsel %vm504, %v1020, 0.0
      %v1038 = vsel %vm505, %v1019, 0.0
      %v1039 = vsel %vm506, %v1018, 0.0
      %v1040 = vsel %vm507, %v1017, 0.0
      %v1041 = vsel %vm508, %v1016, 0.0
      %v1042 = vsel %vm509, %v1015, 0.0
      %v1043 = vsel %vm510, %v1014, 0.0
      %v1044 = vsel %vm511, %v1013, 0.0
      %v1045 = vrot.slane %v981, 1
      %v1046 = vrot.slane %v982, 1
      %v1047 = vrot.slane %v983, 1
      %v1048 = vrot.slane %v984, 1
      %v1049 = vrot.slane %v985, 1
      %v1050 = vrot.slane %v986, 1
      %v1051 = vrot.slane %v987, 1
      %v1052 = vrot.slane %v988, 1
      %v1053 = vrot.slane %v989, 1
      %v1054 = vrot.slane %v990, 1
      %v1055 = vrot.slane %v991, 1
      %v1056 = vrot.slane %v992, 1
      %v1057 = vrot.slane %v993, 1
      %v1058 = vrot.slane %v994, 1
      %v1059 = vrot.slane %v995, 1
      %v1060 = vrot.slane %v996, 1
      %v1061 = vsel %vm665, %v1059, %v1060
      %v1062 = vsel %vm665, %v1058, %v1059
      %v1063 = vsel %vm665, %v1057, %v1058
      %v1064 = vsel %vm665, %v1056, %v1057
      %v1065 = vsel %vm665, %v1055, %v1056
      %v1066 = vsel %vm665, %v1054, %v1055
      %v1067 = vsel %vm665, %v1053, %v1054
      %v1068 = vsel %vm665, %v1052, %v1053
      %v1069 = vsel %vm665, %v1051, %v1052
      %v1070 = vsel %vm665, %v1050, %v1051
      %v1071 = vsel %vm665, %v1049, %v1050
      %v1072 = vsel %vm665, %v1048, %v1049
      %v1073 = vsel %vm665, %v1047, %v1048
      %v1074 = vsel %vm665, %v1046, %v1047
      %v1075 = vsel %vm665, %v1045, %v1046
      %v1076 = vsel %vm665, %v1060, %v1045
      %v1077 = vsel %vm512, %v1075, 0.0
      %v1078 = vsel %vm513, %v1074, 0.0
      %v1079 = vsel %vm514, %v1073, 0.0
      %v1080 = vsel %vm515, %v1072, 0.0
      %v1081 = vsel %vm516, %v1071, 0.0
      %v1082 = vsel %vm517, %v1070, 0.0
      %v1083 = vsel %vm518, %v1069, 0.0
      %v1084 = vsel %vm519, %v1068, 0.0
      %v1085 = vsel %vm520, %v1067, 0.0
      %v1086 = vsel %vm521, %v1066, 0.0
      %v1087 = vsel %vm522, %v1065, 0.0
      %v1088 = vsel %vm523, %v1064, 0.0
      %v1089 = vsel %vm524, %v1063, 0.0
      %v1090 = vsel %vm525, %v1062, 0.0
      %v1091 = vsel %vm526, %v1061, 0.0
      %v1092 = vsel %vm527, %v1076, 0.0
      %v1093 = vld [vmem:[%s6] sm:$0xff]
      %v1094 = vld [vmem:[%s6 + $0x8] sm:$0xff]
      %v1095 = vld [vmem:[%s6 + $0x10] sm:$0xff]
      %v1096 = vld [vmem:[%s6 + $0x18] sm:$0xff]
      %v1097 = vld [vmem:[%s6 + $0x20] sm:$0xff]
      %v1098 = vld [vmem:[%s6 + $0x28] sm:$0xff]
      %v1099 = vld [vmem:[%s6 + $0x30] sm:$0xff]
      %v1100 = vld [vmem:[%s6 + $0x38] sm:$0xff]
      %v1101 = vld [vmem:[%s6 + $0x40] sm:$0xff]
      %v1102 = vld [vmem:[%s6 + $0x48] sm:$0xff]
      %v1103 = vld [vmem:[%s6 + $0x50] sm:$0xff]
      %v1104 = vld [vmem:[%s6 + $0x58] sm:$0xff]
      %v1105 = vld [vmem:[%s6 + $0x60] sm:$0xff]
      %v1106 = vld [vmem:[%s6 + $0x68] sm:$0xff]
      %v1107 = vld [vmem:[%s6 + $0x70] sm:$0xff]
      %v1108 = vld [vmem:[%s6 + $0x78] sm:$0xff]
      %v1109 = vld [vmem:[%s6 + $0x80] sm:$0xff]
      %v1110 = vld [vmem:[%s6 + $0x88] sm:$0xff]
      %v1111 = vld [vmem:[%s6 + $0x90] sm:$0xff]
      %v1112 = vld [vmem:[%s6 + $0x98] sm:$0xff]
      %v1113 = vld [vmem:[%s6 + $0xa0] sm:$0xff]
      %v1114 = vld [vmem:[%s6 + $0xa8] sm:$0xff]
      %v1115 = vld [vmem:[%s6 + $0xb0] sm:$0xff]
      %v1116 = vld [vmem:[%s6 + $0xb8] sm:$0xff]
      %v1117 = vld [vmem:[%s6 + $0xc0] sm:$0xff]
      %v1118 = vld [vmem:[%s6 + $0xc8] sm:$0xff]
      %v1119 = vld [vmem:[%s6 + $0xd0] sm:$0xff]
      %v1120 = vld [vmem:[%s6 + $0xd8] sm:$0xff]
      %v1121 = vld [vmem:[%s6 + $0xe0] sm:$0xff]
      %v1122 = vld [vmem:[%s6 + $0xe8] sm:$0xff]
      %v1123 = vld [vmem:[%s6 + $0xf0] sm:$0xff]
      %v1124 = vld [vmem:[%s6 + $0xf8] sm:$0xff]
      %v1125 = vld [vmem:[%s6 + $0x100] sm:$0xff]
      %v1126 = vld [vmem:[%s6 + $0x108] sm:$0xff]
      %v1127 = vld [vmem:[%s6 + $0x110] sm:$0xff]
      %v1128 = vld [vmem:[%s6 + $0x118] sm:$0xff]
      %v1129 = vld [vmem:[%s6 + $0x120] sm:$0xff]
      %v1130 = vld [vmem:[%s6 + $0x128] sm:$0xff]
      %v1131 = vld [vmem:[%s6 + $0x130] sm:$0xff]
      %v1132 = vld [vmem:[%s6 + $0x138] sm:$0xff]
      %v1133 = vld [vmem:[%s6 + $0x140] sm:$0xff]
      %v1134 = vld [vmem:[%s6 + $0x148] sm:$0xff]
      %v1135 = vld [vmem:[%s6 + $0x150] sm:$0xff]
      %v1136 = vld [vmem:[%s6 + $0x158] sm:$0xff]
      %v1137 = vld [vmem:[%s6 + $0x160] sm:$0xff]
      %v1138 = vld [vmem:[%s6 + $0x168] sm:$0xff]
      %v1139 = vld [vmem:[%s6 + $0x170] sm:$0xff]
      %v1140 = vld [vmem:[%s6 + $0x178] sm:$0xff]
      %1141 = vmatpush.msra.mxu0 %v1108
      %1142 = vmatpush.msra.mxu0 %v1107
      %1143 = vmatpush.msra.mxu0 %v1106
      %1144 = vmatpush.msra.mxu0 %v1105
      %1145 = vmatpush.msra.mxu0 %v1104
      %1146 = vmatpush.msra.mxu0 %v1103
      %1147 = vmatpush.msra.mxu0 %v1102
      %1148 = vmatpush.msra.mxu0 %v1101
      %1149 = vmatpush.msra.mxu0 %v1100
      %1150 = vmatpush.msra.mxu0 %v1099
      %1151 = vmatpush.msra.mxu0 %v1098
      %1152 = vmatpush.msra.mxu0 %v1097
      %1153 = vmatpush.msra.mxu0 %v1096
      %1154 = vmatpush.msra.mxu0 %v1095
      %1155 = vmatpush.msra.mxu0 %v1094
      %1156 = vmatpush.msra.mxu0 %v1093
      %1157 = vmatmul.f32.gmra.mxu0 %v1029
      %v1158 = vpop.f32.mrf.mxu0
      %v1159 = vadd.f32 %v528, %v1158
      %1160 = vmatmul.f32.gmra.mxu0 %v1030
      %v1161 = vpop.f32.mrf.mxu0
      %v1162 = vadd.f32 %v529, %v1161
      %1163 = vmatmul.f32.gmra.mxu0 %v1031
      %v1164 = vpop.f32.mrf.mxu0
      %v1165 = vadd.f32 %v530, %v1164
      %1166 = vmatmul.f32.gmra.mxu0 %v1032
      %v1167 = vpop.f32.mrf.mxu0
      %v1168 = vadd.f32 %v531, %v1167
      %1169 = vmatmul.f32.gmra.mxu0 %v1033
      %v1170 = vpop.f32.mrf.mxu0
      %v1171 = vadd.f32 %v532, %v1170
      %1172 = vmatmul.f32.gmra.mxu0 %v1034
      %v1173 = vpop.f32.mrf.mxu0
      %v1174 = vadd.f32 %v533, %v1173
      %1175 = vmatmul.f32.gmra.mxu0 %v1035
      %v1176 = vpop.f32.mrf.mxu0
      %v1177 = vadd.f32 %v534, %v1176
      %1178 = vmatmul.f32.gmra.mxu0 %v1036
      %v1179 = vpop.f32.mrf.mxu0
      %v1180 = vadd.f32 %v535, %v1179
      %1181 = vmatmul.f32.gmra.mxu0 %v1037
      %v1182 = vpop.f32.mrf.mxu0
      %v1183 = vadd.f32 %v536, %v1182
      %1184 = vmatmul.f32.gmra.mxu0 %v1038
      %v1185 = vpop.f32.mrf.mxu0
      %v1186 = vadd.f32 %v537, %v1185
      %1187 = vmatmul.f32.gmra.mxu0 %v1039
      %v1188 = vpop.f32.mrf.mxu0
      %v1189 = vadd.f32 %v538, %v1188
      %1190 = vmatmul.f32.gmra.mxu0 %v1040
      %v1191 = vpop.f32.mrf.mxu0
      %v1192 = vadd.f32 %v539, %v1191
      %1193 = vmatmul.f32.gmra.mxu0 %v1041
      %v1194 = vpop.f32.mrf.mxu0
      %v1195 = vadd.f32 %v540, %v1194
      %1196 = vmatmul.f32.gmra.mxu0 %v1042
      %v1197 = vpop.f32.mrf.mxu0
      %v1198 = vadd.f32 %v541, %v1197
      %1199 = vmatmul.f32.gmra.mxu0 %v1043
      %v1200 = vpop.f32.mrf.mxu0
      %v1201 = vadd.f32 %v542, %v1200
      %1202 = vmatmul.f32.gmra.mxu0 %v1044
      %v1203 = vpop.f32.mrf.mxu0
      %v1204 = vadd.f32 %v543, %v1203
      %1205 = vdwg.mxu0
      %1206 = vmatpush.msra.mxu0 %v1124
      %1207 = vmatpush.msra.mxu0 %v1123
      %1208 = vmatpush.msra.mxu0 %v1122
      %1209 = vmatpush.msra.mxu0 %v1121
      %1210 = vmatpush.msra.mxu0 %v1120
      %1211 = vmatpush.msra.mxu0 %v1119
      %1212 = vmatpush.msra.mxu0 %v1118
      %1213 = vmatpush.msra.mxu0 %v1117
      %1214 = vmatpush.msra.mxu0 %v1116
      %1215 = vmatpush.msra.mxu0 %v1115
      %1216 = vmatpush.msra.mxu0 %v1114
      %1217 = vmatpush.msra.mxu0 %v1113
      %1218 = vmatpush.msra.mxu0 %v1112
      %1219 = vmatpush.msra.mxu0 %v1111
      %1220 = vmatpush.msra.mxu0 %v1110
      %1221 = vmatpush.msra.mxu0 %v1109
      %1222 = vmatmul.f32.gmra.mxu0 %v981
      %v1223 = vpop.f32.mrf.mxu0
      %v1224 = vadd.f32 %v1159, %v1223
      %1225 = vmatmul.f32.gmra.mxu0 %v982
      %v1226 = vpop.f32.mrf.mxu0
      %v1227 = vadd.f32 %v1162, %v1226
      %1228 = vmatmul.f32.gmra.mxu0 %v983
      %v1229 = vpop.f32.mrf.mxu0
      %v1230 = vadd.f32 %v1165, %v1229
      %1231 = vmatmul.f32.gmra.mxu0 %v984
      %v1232 = vpop.f32.mrf.mxu0
      %v1233 = vadd.f32 %v1168, %v1232
      %1234 = vmatmul.f32.gmra.mxu0 %v985
      %v1235 = vpop.f32.mrf.mxu0
      %v1236 = vadd.f32 %v1171, %v1235
      %1237 = vmatmul.f32.gmra.mxu0 %v986
      %v1238 = vpop.f32.mrf.mxu0
      %v1239 = vadd.f32 %v1174, %v1238
      %1240 = vmatmul.f32.gmra.mxu0 %v987
      %v1241 = vpop.f32.mrf.mxu0
      %v1242 = vadd.f32 %v1177, %v1241
      %1243 = vmatmul.f32.gmra.mxu0 %v988
      %v1244 = vpop.f32.mrf.mxu0
      %v1245 = vadd.f32 %v1180, %v1244
      %1246 = vmatmul.f32.gmra.mxu0 %v989
      %v1247 = vpop.f32.mrf.mxu0
      %v1248 = vadd.f32 %v1183, %v1247
      %1249 = vmatmul.f32.gmra.mxu0 %v990
      %v1250 = vpop.f32.mrf.mxu0
      %v1251 = vadd.f32 %v1186, %v1250
      %1252 = vmatmul.f32.gmra.mxu0 %v991
      %v1253 = vpop.f32.mrf.mxu0
      %v1254 = vadd.f32 %v1189, %v1253
      %1255 = vmatmul.f32.gmra.mxu0 %v992
      %v1256 = vpop.f32.mrf.mxu0
      %v1257 = vadd.f32 %v1192, %v1256
      %1258 = vmatmul.f32.gmra.mxu0 %v993
      %v1259 = vpop.f32.mrf.mxu0
      %v1260 = vadd.f32 %v1195, %v1259
      %1261 = vmatmul.f32.gmra.mxu0 %v994
      %v1262 = vpop.f32.mrf.mxu0
      %v1263 = vadd.f32 %v1198, %v1262
      %1264 = vmatmul.f32.gmra.mxu0 %v995
      %v1265 = vpop.f32.mrf.mxu0
      %v1266 = vadd.f32 %v1201, %v1265
      %1267 = vmatmul.f32.gmra.mxu0 %v996
      %v1268 = vpop.f32.mrf.mxu0
      %v1269 = vadd.f32 %v1204, %v1268
      %1270 = vdwg.mxu0
      %1271 = vmatpush.msra.mxu0 %v1140
      %1272 = vmatpush.msra.mxu0 %v1139
      %1273 = vmatpush.msra.mxu0 %v1138
      %1274 = vmatpush.msra.mxu0 %v1137
      %1275 = vmatpush.msra.mxu0 %v1136
      %1276 = vmatpush.msra.mxu0 %v1135
      %1277 = vmatpush.msra.mxu0 %v1134
      %1278 = vmatpush.msra.mxu0 %v1133
      %1279 = vmatpush.msra.mxu0 %v1132
      %1280 = vmatpush.msra.mxu0 %v1131
      %1281 = vmatpush.msra.mxu0 %v1130
      %1282 = vmatpush.msra.mxu0 %v1129
      %1283 = vmatpush.msra.mxu0 %v1128
      %1284 = vmatpush.msra.mxu0 %v1127
      %1285 = vmatpush.msra.mxu0 %v1126
      %1286 = vmatpush.msra.mxu0 %v1125
      %1287 = vmatmul.f32.gmra.mxu0 %v1077
      %v1288 = vpop.f32.mrf.mxu0
      %v1289 = vadd.f32 %v1224, %v1288
      %1290 = vmatmul.f32.gmra.mxu0 %v1078
      %v1291 = vpop.f32.mrf.mxu0
      %v1292 = vadd.f32 %v1227, %v1291
      %1293 = vmatmul.f32.gmra.mxu0 %v1079
      %v1294 = vpop.f32.mrf.mxu0
      %v1295 = vadd.f32 %v1230, %v1294
      %1296 = vmatmul.f32.gmra.mxu0 %v1080
      %v1297 = vpop.f32.mrf.mxu0
      %v1298 = vadd.f32 %v1233, %v1297
      %1299 = vmatmul.f32.gmra.mxu0 %v1081
      %v1300 = vpop.f32.mrf.mxu0
      %v1301 = vadd.f32 %v1236, %v1300
      %1302 = vmatmul.f32.gmra.mxu0 %v1082
      %v1303 = vpop.f32.mrf.mxu0
      %v1304 = vadd.f32 %v1239, %v1303
      %1305 = vmatmul.f32.gmra.mxu0 %v1083
      %v1306 = vpop.f32.mrf.mxu0
      %v1307 = vadd.f32 %v1242, %v1306
      %1308 = vmatmul.f32.gmra.mxu0 %v1084
      %v1309 = vpop.f32.mrf.mxu0
      %v1310 = vadd.f32 %v1245, %v1309
      %1311 = vmatmul.f32.gmra.mxu0 %v1085
      %v1312 = vpop.f32.mrf.mxu0
      %v1313 = vadd.f32 %v1248, %v1312
      %1314 = vmatmul.f32.gmra.mxu0 %v1086
      %v1315 = vpop.f32.mrf.mxu0
      %v1316 = vadd.f32 %v1251, %v1315
      %1317 = vmatmul.f32.gmra.mxu0 %v1087
      %v1318 = vpop.f32.mrf.mxu0
      %v1319 = vadd.f32 %v1254, %v1318
      %1320 = vmatmul.f32.gmra.mxu0 %v1088
      %v1321 = vpop.f32.mrf.mxu0
      %v1322 = vadd.f32 %v1257, %v1321
      %1323 = vmatmul.f32.gmra.mxu0 %v1089
      %v1324 = vpop.f32.mrf.mxu0
      %v1325 = vadd.f32 %v1260, %v1324
      %1326 = vmatmul.f32.gmra.mxu0 %v1090
      %v1327 = vpop.f32.mrf.mxu0
      %v1328 = vadd.f32 %v1263, %v1327
      %1329 = vmatmul.f32.gmra.mxu0 %v1091
      %v1330 = vpop.f32.mrf.mxu0
      %v1331 = vadd.f32 %v1266, %v1330
      %1332 = vmatmul.f32.gmra.mxu0 %v1092
      %v1333 = vpop.f32.mrf.mxu0
      %v1334 = vadd.f32 %v1269, %v1333
      %1335 = vdwg.mxu0
      %1336 = vst [vmem:[%s285] sm:$0xff] %v1289
      %1337 = vst [vmem:[%s285 + $0x8] sm:$0xff] %v1292
      %1338 = vst [vmem:[%s285 + $0x10] sm:$0xff] %v1295
      %1339 = vst [vmem:[%s285 + $0x18] sm:$0xff] %v1298
      %1340 = vst [vmem:[%s285 + $0x20] sm:$0xff] %v1301
      %1341 = vst [vmem:[%s285 + $0x28] sm:$0xff] %v1304
      %1342 = vst [vmem:[%s285 + $0x30] sm:$0xff] %v1307
      %1343 = vst [vmem:[%s285 + $0x38] sm:$0xff] %v1310
      %1344 = vst [vmem:[%s285 + $0x40] sm:$0xff] %v1313
      %1345 = vst [vmem:[%s285 + $0x48] sm:$0xff] %v1316
      %1346 = vst [vmem:[%s285 + $0x50] sm:$0xff] %v1319
      %1347 = vst [vmem:[%s285 + $0x58] sm:$0xff] %v1322
      %1348 = vst [vmem:[%s285 + $0x60] sm:$0xff] %v1325
      %1349 = vst [vmem:[%s285 + $0x68] sm:$0xff] %v1328
      %1350 = vst [vmem:[%s285 + $0x70] sm:$0xff] %v1331
      %1351 = vst [vmem:[%s285 + $0x78] sm:$0xff] %v1334
      %s1352 = smul.u32 8, %s18
      %p1353 = scmp.lt.s32.totalorder %s1352, 15
      %s1354 = scalar_select %p1353, %s1352, 15
      %s1355 = smul.addr %s1354, 2
      %s1356 = smul.addr %s1355, 8
      %s1357 = scalar_lea.vmem %s7, %s1356
      // Predicated region
      $region49: #{basic_block_pallas.1} parent=47 // pred_check
        %p1358 = pneg %p188
      $region50: #{basic_block_pallas.1} parent=47 // pred_check_branch
        %1360 = sbr.rel (%p1358) target = $region52
      $region51: #{basic_block_pallas.1} parent=47 // pred_region
        %s1361 = smul.u32 8, %s18
      $region52: #{basic_block_pallas.1} parent=47 // pred_fallthru
        _
    $region48: #{basic_block_pallas.1} parent=5 // pred_fallthru
      _
    %p1362 = scmp.le.s32.totalorder 2, %s13
    // Predicated region
    $region53: #{basic_block_pallas.1} parent=5 // pred_check
      %p1363 = pneg %p1362
    $region54: #{basic_block_pallas.1} parent=5 // pred_check_branch
      %1365 = sbr.rel (%p1363) target = $region56
    $region55: #{basic_block_pallas.1} parent=5 // pred_region
      %s1366 = ssub.s32 %s13, 2
      // Predicated region
      $region57: #{basic_block_pallas.1} parent=55 // pred_check
        %p1367 = pneg %p194
      $region58: #{basic_block_pallas.1} parent=55 // pred_check_branch
        %1369 = sbr.rel (%p1367) target = $region60
      $region59: #{basic_block_pallas.1} parent=55 // pred_region
        %s1370 = smul.u32 8, %s19
        %p1371 = scmp.lt.s32.totalorder %s1370, 15
        %s1372 = scalar_select %p1371, %s1370, 15
        %s1373 = smul.addr %s1372, 2
        %s1374 = smul.addr %s1373, 8
        %s1375 = scalar_lea.vmem %s7, %s1374
      $region60: #{basic_block_pallas.1} parent=55 // pred_fallthru
        _
    $region56: #{basic_block_pallas.1} parent=5 // pred_fallthru
      _
  $region6: #{basic_block_pallas.1} parent=0 // loop_footer
    %s17 = sadd.s32 1, %s13
  $region7: #{basic_block_pallas.1} parent=0 // loop_footer_branch
    %12 = sbr.rel target = $region3
  $region8: #{basic_block_pallas.1} parent=0 // loop_exit
    _

</llo_original>
